<compile_context>
chip_gen: v6e
topology: v6e:2x2x1
jax: 0.10.0
libtpu: 0.0.40
codegen_flags: <defaults>
</compile_context>

<pallas_src>
import functools

import jax
import jax.numpy as jnp
from jax.experimental import pallas as pl
from jax.experimental.pallas import tpu as pltpu


def _round_up(x, m):
    return ((x + m - 1) // m) * m


# ---------------------------------------------------------------------------
# Prologue: fused projection  proj = h_src @ [W | W@attn_l | W@attn_r]
# Runs once per layer (row-tiled grid), NOT once per dst tile.
# ---------------------------------------------------------------------------
def _proj_kernel(h_ref, w_ref, o_ref):
    o_ref[...] = jnp.dot(h_ref[...], w_ref[...],
                         preferred_element_type=jnp.float32)


def _run_projection(h_src_p, w_all_p, tile_s):
    ns_pad, fin_pad = h_src_p.shape
    pw = w_all_p.shape[1]
    return pl.pallas_call(
        _proj_kernel,
        out_shape=jax.ShapeDtypeStruct((ns_pad, pw), jnp.float32),
        grid=(ns_pad // tile_s,),
        in_specs=[
            pl.BlockSpec((tile_s, fin_pad), lambda i: (i, 0)),   # h rows tile
            pl.BlockSpec((fin_pad, pw), lambda i: (0, 0)),       # fused weight
        ],
        out_specs=pl.BlockSpec((tile_s, pw), lambda i: (i, 0)),
        compiler_params=pltpu.CompilerParams(
            dimension_semantics=("parallel",)),
    )(h_src_p, w_all_p)


# ---------------------------------------------------------------------------
# Per-dst-tile aggregation: masked edge softmax + attention-weighted sum.
# ---------------------------------------------------------------------------
def _gat_agg_kernel(feat_ref, el_ref, er_ref, adj_ref, out_ref, *,
                    num_heads, out_feats, head_stride, negative_slope,
                    apply_elu, mean_heads, out_pad):
    mask = adj_ref[...].astype(jnp.float32) > 0.0            # [Td, Ns]
    el = el_ref[...]                                         # [H, 1, Ns] f32
    er = er_ref[...]                                         # [H, Td, 1] f32

    # Head-batched attention logits, LeakyReLU, stable masked softmax.
    e = el + er                                              # [H, Td, Ns]
    e = jnp.where(e > 0, e, negative_slope * e)              # LeakyReLU
    e = jnp.where(mask[None, :, :], e, -1e30)                # non-edges
    e_max = jnp.max(e, axis=-1, keepdims=True)               # [H, Td, 1]
    s = jnp.where(mask[None, :, :], jnp.exp(e - e_max), 0.0)  # [H, Td, Ns]
    s = s.astype(jnp.bfloat16)

    feat = feat_ref[...]                                     # [Ns, H*stride] bf16
    parts = []
    acc = None
    for h in range(num_heads):                               # static unroll
        fs = feat[:, h * head_stride:(h + 1) * head_stride]  # [Ns, stride]
        # Denominator comes out of the same MXU push (ones column at col D).
        ft_aug = jnp.dot(s[h], fs, preferred_element_type=jnp.float32)
        denom = ft_aug[:, out_feats:out_feats + 1]           # [Td, 1]
        ft = ft_aug[:, :out_feats] * pl.reciprocal(
            jnp.maximum(denom, 1e-20), approx=True)
        if apply_elu:                                        # self.activation
            ft = jnp.where(ft > 0, ft, jnp.exp(jnp.minimum(ft, 0.0)) - 1.0)
        if mean_heads:                                       # final .mean(1)
            acc = ft if acc is None else acc + ft
        else:                                                # hidden .flatten(1)
            parts.append(ft)

    if mean_heads:
        result = acc * (1.0 / num_heads)
    else:
        result = jnp.concatenate(parts, axis=-1)

    cur = result.shape[-1]
    if out_pad > cur:                                        # lane-dense store
        result = jnp.concatenate(
            [result, jnp.zeros((result.shape[0], out_pad - cur), jnp.float32)],
            axis=-1)
    out_ref[...] = result.astype(out_ref.dtype)


def gat_layer(h_src, w, attn_l, attn_r, adj, n_dst, *, num_heads, out_feats,
              negative_slope=0.2, apply_elu=False, mean_heads=False,
              tile_d_max=128, out_dtype=jnp.float32):
    """One GATLayer forward over a NodeFlow block.

    NodeFlow convention: the n_dst destination nodes are the leading n_dst
    rows of the source layer, so dst projections are row-prefixes of the src
    projections.  adj is a dense [n_dst, n_src] 0/1 edge mask (dst <- src).
    """
    n_src, in_feats = h_src.shape
    assert adj.shape == (n_dst, n_src)
    assert n_dst <= n_src, "NodeFlow convention: dst nodes lead the src rows"

    H, D = num_heads, out_feats
    HD = H * D
    out_dim = D if mean_heads else HD

    # ---- lane-dense layout / padding -------------------------------------
    fin_pad = _round_up(in_feats, 128)
    tile_d = min(tile_d_max, _round_up(n_dst, 32))        # 32: int8 packing
    n_dst_pad = _round_up(n_dst, tile_d)
    n_src_pad = max(_round_up(n_src, 128), n_dst_pad)
    head_stride = _round_up(D + 1, 128)                   # feats + ones col
    fw = H * head_stride
    out_pad = _round_up(out_dim, 128)
    pw = _round_up(HD + 2 * H, 128)

    # ---- fold attn_l / attn_r into the fc weight, pre-cast to bf16 -------
    w3 = w.reshape(in_feats, H, D)
    w_al = jnp.einsum('fhd,hd->fh', w3, attn_l)            # [Fin, H]
    w_ar = jnp.einsum('fhd,hd->fh', w3, attn_r)            # [Fin, H]
    w_all = jnp.concatenate([w, w_al, w_ar], axis=1)       # [Fin, HD+2H]
    w_all_p = jnp.zeros((fin_pad, pw), jnp.bfloat16
                        ).at[:in_feats, :HD + 2 * H].set(w_all.astype(jnp.bfloat16))
    h_src_p = jnp.zeros((n_src_pad, fin_pad), jnp.bfloat16
                        ).at[:n_src, :in_feats].set(h_src.astype(jnp.bfloat16))

    # ---- prologue: fused projection, executed once ------------------------
    proj = _run_projection(h_src_p, w_all_p, tile_s=128)    # [Ns_pad, PW] f32

    # feat_src per head, with a ones column at index D (folds softmax denom).
    feat = proj[:, :HD].reshape(n_src_pad, H, D)
    fa = jnp.zeros((n_src_pad, H, head_stride), jnp.float32)
    fa = fa.at[:, :, :D].set(feat)
    fa = fa.at[:, :, D].set(1.0)
    feat_aug = fa.reshape(n_src_pad, fw).astype(jnp.bfloat16)

    # el for all src nodes; er for dst nodes (= leading rows of src).
    el = proj[:, HD:HD + H].T.reshape(H, 1, n_src_pad)               # f32
    er = jnp.zeros((n_dst_pad, H), jnp.float32
                   ).at[:n_dst].set(proj[:n_dst, HD + H:HD + 2 * H])
    er = er.T.reshape(H, n_dst_pad, 1)                               # f32

    # adjacency streamed as int8 (only O(Nd*Ns) input).
    adj_p = jnp.zeros((n_dst_pad, n_src_pad), jnp.int8
                      ).at[:n_dst, :n_src].set((adj > 0).astype(jnp.int8))

    # ---- VMEM budget (explicit, with headroom) ----------------------------
    out_bytes = jnp.dtype(out_dtype).itemsize
    est = 2 * (n_src_pad * fw * 2                # feat_aug (bf16, buffered)
               + H * n_src_pad * 4               # el
               + H * tile_d * 128 * 4            # er (lane-padded alloc)
               + tile_d * n_src_pad              # adj int8 tile
               + tile_d * out_pad * out_bytes)   # out tile
    est += 4 * H * tile_d * n_src_pad * 4        # e / s slabs + temporaries
    vmem_limit = int(min(max(2 * est, 32 << 20), 48 << 20))

    kernel = functools.partial(
        _gat_agg_kernel, num_heads=H, out_feats=D, head_stride=head_stride,
        negative_slope=negative_slope, apply_elu=apply_elu,
        mean_heads=mean_heads, out_pad=out_pad)

    out = pl.pallas_call(
        kernel,
        out_shape=jax.ShapeDtypeStruct((n_dst_pad, out_pad), out_dtype),
        grid=(n_dst_pad // tile_d,),
        in_specs=[
            pl.BlockSpec((n_src_pad, fw), lambda i: (0, 0)),        # feat_aug
            pl.BlockSpec((H, 1, n_src_pad), lambda i: (0, 0, 0)),   # el
            pl.BlockSpec((H, tile_d, 1), lambda i: (0, i, 0)),      # er tile
            pl.BlockSpec((tile_d, n_src_pad), lambda i: (i, 0)),    # adj tile
        ],
        out_specs=pl.BlockSpec((tile_d, out_pad), lambda i: (i, 0)),
        compiler_params=pltpu.CompilerParams(
            dimension_semantics=("parallel",),
            vmem_limit_bytes=vmem_limit),
    )(feat_aug, el, er, adj_p)

    return out[:n_dst, :out_dim]


def init_gat_sampling_params(key, in_feats, n_hidden, n_classes, n_layers, heads):
    """Deterministic xavier-normal-style init (gain = sqrt(2), relu gain)."""
    dims_in = [in_feats] + [n_hidden * heads[l - 1] for l in range(1, n_layers + 1)]
    dims_out = [n_hidden] * n_layers + [n_classes]
    gain = jnp.sqrt(2.0)
    params = []
    for l in range(n_layers + 1):
        fi, fo, h = dims_in[l], dims_out[l], heads[l]
        key, k1, k2, k3 = jax.random.split(key, 4)
        std_w = gain * jnp.sqrt(2.0 / (fi + fo * h))
        w = std_w * jax.random.normal(k1, (fi, fo * h), jnp.float32)
        std_a = gain * jnp.sqrt(2.0 / (h * fo + fo))
        al = std_a * jax.random.normal(k2, (h, fo), jnp.float32)
        ar = std_a * jax.random.normal(k3, (h, fo), jnp.float32)
        params.append((w, al, ar))
    return params


def gat_sampling_forward(params, features, adjs, *, layer_sizes, n_layers,
                         n_hidden, n_classes, heads, negative_slope=0.2):
    # NodeFlow convention: layer k+1 nodes are the FIRST layer_sizes[k+1]
    # rows of layer k, so dst features are the leading rows of src.
    act = features                                    # nf.layers[0] activations
    for i in range(n_layers):
        w, al, ar = params[i]
        act = gat_layer(act, w, al, ar, adjs[i], layer_sizes[i + 1],
                        num_heads=heads[i], out_feats=n_hidden,
                        negative_slope=negative_slope, apply_elu=True,
                        mean_heads=False, out_dtype=jnp.bfloat16)  # flatten(1)
    w, al, ar = params[-1]
    logits = gat_layer(act, w, al, ar, adjs[n_layers],
                       layer_sizes[n_layers + 1],
                       num_heads=heads[-1], out_feats=n_classes,
                       negative_slope=negative_slope, apply_elu=False,
                       mean_heads=True, out_dtype=jnp.float32)     # .mean(1)
    return logits


if __name__ == "__main__":
    key = jax.random.PRNGKey(0)

    in_feats, n_hidden, n_classes, n_layers = 16, 16, 8, 2
    heads = [2, 2, 2]                       # len == n_layers + 1
    layer_sizes = [32, 24, 16, 8]           # NodeFlow layers 0 .. n_layers+1

    key, kf = jax.random.split(key)
    features = jax.random.normal(kf, (layer_sizes[0], in_feats), jnp.float32)

    # Dense block adjacencies [N_dst, N_src]; self edge (dst j <- src j)
    # guarantees every dst node has at least one in-edge.
    adjs = []
    for b in range(n_layers + 1):
        nd, ns = layer_sizes[b + 1], layer_sizes[b]
        key, ka = jax.random.split(key)
        adj = jax.random.bernoulli(ka, 0.3, (nd, ns)).astype(jnp.float32)
        adj = adj.at[jnp.arange(nd), jnp.arange(nd)].set(1.0)
        adjs.append(adj)

    key, kp = jax.random.split(key)
    params = init_gat_sampling_params(kp, in_feats, n_hidden, n_classes,
                                      n_layers, heads)

    fwd = jax.jit(functools.partial(
        gat_sampling_forward, layer_sizes=layer_sizes, n_layers=n_layers,
        n_hidden=n_hidden, n_classes=n_classes, heads=heads))
    logits = fwd(params, features, adjs)
    jax.block_until_ready(logits)
    assert logits.shape == (layer_sizes[-1], n_classes)
    assert bool(jnp.all(jnp.isfinite(logits)))
    print("KERNEL_OK")
</pallas_src>

<mosaic_0001>
module attributes {stable_mosaic.version = 11 : i64} {
  func.func @_proj_kernel(%arg0: i32, %arg1: memref<128x128xbf16, #tpu.memory_space<vmem>>, %arg2: memref<128x128xbf16, #tpu.memory_space<vmem>>, %arg3: memref<128x128xf32, #tpu.memory_space<vmem>>) attributes {dimension_semantics = [#tpu.dimension_semantics<parallel>], iteration_bounds = array<i64: 1>, scalar_prefetch = 0 : i64, scratch_operands = 0 : i64, tpu.core_type = #tpu.core_type<tc>, window_params = [{transform_indices = @transform_0, window_bounds = array<i64: 128, 128>}, {pipeline_mode = #tpu.pipeline_mode<synchronous>, transform_indices = @transform_1, window_bounds = array<i64: 128, 128>}, {transform_indices = @transform_2, window_bounds = array<i64: 128, 128>}]} {
    %c0 = arith.constant 0 : index
    %c0_0 = arith.constant 0 : index
    %0 = vector.load %arg1[%c0, %c0_0] : memref<128x128xbf16, #tpu.memory_space<vmem>>, vector<128x128xbf16>
    %c0_1 = arith.constant 0 : index
    %c0_2 = arith.constant 0 : index
    %1 = vector.load %arg2[%c0_1, %c0_2] : memref<128x128xbf16, #tpu.memory_space<vmem>>, vector<128x128xbf16>
    %cst = arith.constant dense<0.000000e+00> : vector<128x128xf32>
    %2 = tpu.matmul %0, %1, %cst {dimension_numbers = #tpu.dot_dimension_numbers<[1], [0], [0], [1], [0, 0, 1, 1], [], []>} : vector<128x128xbf16>, vector<128x128xbf16>, vector<128x128xf32> -> vector<128x128xf32>
    %c0_3 = arith.constant 0 : index
    %c0_4 = arith.constant 0 : index
    %3 = vector.load %arg3[%c0_3, %c0_4] : memref<128x128xf32, #tpu.memory_space<vmem>>, vector<128x128xf32>
    tpu.vector_store %arg3[%c0_3, %c0_4], %2 {strides = array<i32>} : memref<128x128xf32, #tpu.memory_space<vmem>>, vector<128x128xf32>,
    return
  }
  func.func @transform_0(%arg0: i32) -> (i32, i32) {
    %c0_i32 = arith.constant 0 : i32
    %c0_i32_0 = arith.constant 0 : i32
    return %arg0, %c0_i32 : i32, i32
  }
  func.func @transform_1(%arg0: i32) -> (i32, i32) {
    %c0_i32 = arith.constant 0 : i32
    %c0_i32_0 = arith.constant 0 : i32
    %c0_i32_1 = arith.constant 0 : i32
    return %c0_i32, %c0_i32_0 : i32, i32
  }
  func.func @transform_2(%arg0: i32) -> (i32, i32) {
    %c0_i32 = arith.constant 0 : i32
    %c0_i32_0 = arith.constant 0 : i32
    return %arg0, %c0_i32 : i32, i32
  }
}

module attributes {stable_mosaic.version = 11 : i64} {
  func.func @_gat_agg_kernel(%arg0: i32, %arg1: memref<128x256xbf16, #tpu.memory_space<vmem>>, %arg2: memref<2x1x128xf32, #tpu.memory_space<vmem>>, %arg3: memref<2x32x1xf32, #tpu.memory_space<vmem>>, %arg4: memref<32x128xi8, #tpu.memory_space<vmem>>, %arg5: memref<32x128xbf16, #tpu.memory_space<vmem>>) attributes {dimension_semantics = [#tpu.dimension_semantics<parallel>], iteration_bounds = array<i64: 1>, scalar_prefetch = 0 : i64, scratch_operands = 0 : i64, tpu.core_type = #tpu.core_type<tc>, window_params = [{pipeline_mode = #tpu.pipeline_mode<synchronous>, transform_indices = @transform_0, window_bounds = array<i64: 128, 256>}, {pipeline_mode = #tpu.pipeline_mode<synchronous>, transform_indices = @transform_1, window_bounds = array<i64: 2, 1, 128>}, {transform_indices = @transform_2, window_bounds = array<i64: 2, 32, 1>}, {transform_indices = @transform_3, window_bounds = array<i64: 32, 128>}, {transform_indices = @transform_4, window_bounds = array<i64: 32, 128>}]} {
    %c0 = arith.constant 0 : index
    %c0_0 = arith.constant 0 : index
    %0 = vector.load %arg4[%c0, %c0_0] : memref<32x128xi8, #tpu.memory_space<vmem>>, vector<32x128xi8>
    %1 = arith.sitofp %0 : vector<32x128xi8> to vector<32x128xf32>
    %cst = arith.constant 0.000000e+00 : f32
    %2 = vector.broadcast %cst : f32 to vector<32x128xf32>
    %3 = arith.cmpf ogt, %1, %2 : vector<32x128xf32>
    %c0_1 = arith.constant 0 : index
    %c0_2 = arith.constant 0 : index
    %c0_3 = arith.constant 0 : index
    %4 = vector.load %arg2[%c0_1, %c0_2, %c0_3] : memref<2x1x128xf32, #tpu.memory_space<vmem>>, vector<2x1x128xf32>
    %c0_4 = arith.constant 0 : index
    %c0_5 = arith.constant 0 : index
    %c0_6 = arith.constant 0 : index
    %5 = vector.load %arg3[%c0_4, %c0_5, %c0_6] : memref<2x32x1xf32, #tpu.memory_space<vmem>>, vector<2x32x1xf32>
    %6 = vector.broadcast %4 : vector<2x1x128xf32> to vector<2x32x128xf32>
    %7 = vector.broadcast %5 : vector<2x32x1xf32> to vector<2x32x128xf32>
    %8 = arith.addf %6, %7 : vector<2x32x128xf32>
    %cst_7 = arith.constant 0.000000e+00 : f32
    %9 = vector.broadcast %cst_7 : f32 to vector<2x32x128xf32>
    %10 = arith.cmpf ogt, %8, %9 : vector<2x32x128xf32>
    %cst_8 = arith.constant 2.000000e-01 : f32
    %11 = vector.broadcast %cst_8 : f32 to vector<2x32x128xf32>
    %12 = arith.mulf %11, %8 : vector<2x32x128xf32>
    %13 = arith.select %10, %8, %12 : vector<2x32x128xi1>, vector<2x32x128xf32>
    %14 = vector.shape_cast %3 : vector<32x128xi1> to vector<1x32x128xi1>
    %cst_9 = arith.constant -1.000000e+30 : f32
    %15 = vector.shape_cast %14 : vector<1x32x128xi1> to vector<1x32x128xi1>
    %16 = vector.broadcast %15 : vector<1x32x128xi1> to vector<2x32x128xi1>
    %17 = vector.broadcast %cst_9 : f32 to vector<2x32x128xf32>
    %18 = arith.select %16, %13, %17 : vector<2x32x128xi1>, vector<2x32x128xf32>
    %cst_10 = arith.constant dense<0xFF800000> : vector<2x32xf32>
    %19 = vector.multi_reduction <maximumf>, %18, %cst_10 [2] : vector<2x32x128xf32> to vector<2x32xf32>
    %20 = vector.shape_cast %19 : vector<2x32xf32> to vector<2x32x1xf32>
    %21 = vector.shape_cast %3 : vector<32x128xi1> to vector<1x32x128xi1>
    %22 = vector.broadcast %20 : vector<2x32x1xf32> to vector<2x32x128xf32>
    %23 = arith.subf %18, %22 : vector<2x32x128xf32>
    %24 = math.exp %23 : vector<2x32x128xf32>
    %cst_11 = arith.constant 0.000000e+00 : f32
    %25 = vector.shape_cast %21 : vector<1x32x128xi1> to vector<1x32x128xi1>
    %26 = vector.broadcast %25 : vector<1x32x128xi1> to vector<2x32x128xi1>
    %27 = vector.broadcast %cst_11 : f32 to vector<2x32x128xf32>
    %28 = arith.select %26, %24, %27 : vector<2x32x128xi1>, vector<2x32x128xf32>
    %29 = arith.truncf %28 : vector<2x32x128xf32> to vector<2x32x128xbf16>
    %c0_12 = arith.constant 0 : index
    %c0_13 = arith.constant 0 : index
    %30 = vector.load %arg1[%c0_12, %c0_13] : memref<128x256xbf16, #tpu.memory_space<vmem>>, vector<128x256xbf16>
    %31 = vector.extract_strided_slice %30 {offsets = [0, 0], sizes = [128, 128], strides = [1, 1]} : vector<128x256xbf16> to vector<128x128xbf16>
    %32 = vector.extract_strided_slice %29 {offsets = [0, 0, 0], sizes = [1, 32, 128], strides = [1, 1, 1]} : vector<2x32x128xbf16> to vector<1x32x128xbf16>
    %33 = vector.shape_cast %32 : vector<1x32x128xbf16> to vector<32x128xbf16>
    %cst_14 = arith.constant dense<0.000000e+00> : vector<32x128xf32>
    %34 = tpu.matmul %33, %31, %cst_14 {dimension_numbers = #tpu.dot_dimension_numbers<[1], [0], [0], [1], [0, 0, 1, 1], [], []>} : vector<32x128xbf16>, vector<128x128xbf16>, vector<32x128xf32> -> vector<32x128xf32>
    %35 = vector.extract_strided_slice %34 {offsets = [0, 16], sizes = [32, 1], strides = [1, 1]} : vector<32x128xf32> to vector<32x1xf32>
    %36 = vector.extract_strided_slice %34 {offsets = [0, 0], sizes = [32, 16], strides = [1, 1]} : vector<32x128xf32> to vector<32x16xf32>
    %cst_15 = arith.constant 9.99999968E-21 : f32
    %37 = vector.broadcast %cst_15 : f32 to vector<32x1xf32>
    %38 = arith.maximumf %35, %37 : vector<32x1xf32>
    %39 = tpu.reciprocal %38 {approx = true} : vector<32x1xf32> -> vector<32x1xf32>
    %40 = vector.broadcast %39 : vector<32x1xf32> to vector<32x16xf32>
    %41 = arith.mulf %36, %40 : vector<32x16xf32>
    %cst_16 = arith.constant 0.000000e+00 : f32
    %42 = vector.broadcast %cst_16 : f32 to vector<32x16xf32>
    %43 = arith.cmpf ogt, %41, %42 : vector<32x16xf32>
    %cst_17 = arith.constant 0.000000e+00 : f32
    %44 = vector.broadcast %cst_17 : f32 to vector<32x16xf32>
    %45 = arith.minimumf %41, %44 : vector<32x16xf32>
    %46 = math.exp %45 : vector<32x16xf32>
    %cst_18 = arith.constant 1.000000e+00 : f32
    %47 = vector.broadcast %cst_18 : f32 to vector<32x16xf32>
    %48 = arith.subf %46, %47 : vector<32x16xf32>
    %49 = arith.select %43, %41, %48 : vector<32x16xi1>, vector<32x16xf32>
    %50 = vector.extract_strided_slice %30 {offsets = [0, 128], sizes = [128, 128], strides = [1, 1]} : vector<128x256xbf16> to vector<128x128xbf16>
    %51 = vector.extract_strided_slice %29 {offsets = [1, 0, 0], sizes = [1, 32, 128], strides = [1, 1, 1]} : vector<2x32x128xbf16> to vector<1x32x128xbf16>
    %52 = vector.shape_cast %51 : vector<1x32x128xbf16> to vector<32x128xbf16>
    %cst_19 = arith.constant dense<0.000000e+00> : vector<32x128xf32>
    %53 = tpu.matmul %52, %50, %cst_19 {dimension_numbers = #tpu.dot_dimension_numbers<[1], [0], [0], [1], [0, 0, 1, 1], [], []>} : vector<32x128xbf16>, vector<128x128xbf16>, vector<32x128xf32> -> vector<32x128xf32>
    %54 = vector.extract_strided_slice %53 {offsets = [0, 16], sizes = [32, 1], strides = [1, 1]} : vector<32x128xf32> to vector<32x1xf32>
    %55 = vector.extract_strided_slice %53 {offsets = [0, 0], sizes = [32, 16], strides = [1, 1]} : vector<32x128xf32> to vector<32x16xf32>
    %cst_20 = arith.constant 9.99999968E-21 : f32
    %56 = vector.broadcast %cst_20 : f32 to vector<32x1xf32>
    %57 = arith.maximumf %54, %56 : vector<32x1xf32>
    %58 = tpu.reciprocal %57 {approx = true} : vector<32x1xf32> -> vector<32x1xf32>
    %59 = vector.broadcast %58 : vector<32x1xf32> to vector<32x16xf32>
    %60 = arith.mulf %55, %59 : vector<32x16xf32>
    %cst_21 = arith.constant 0.000000e+00 : f32
    %61 = vector.broadcast %cst_21 : f32 to vector<32x16xf32>
    %62 = arith.cmpf ogt, %60, %61 : vector<32x16xf32>
    %cst_22 = arith.constant 0.000000e+00 : f32
    %63 = vector.broadcast %cst_22 : f32 to vector<32x16xf32>
    %64 = arith.minimumf %60, %63 : vector<32x16xf32>
    %65 = math.exp %64 : vector<32x16xf32>
    %cst_23 = arith.constant 1.000000e+00 : f32
    %66 = vector.broadcast %cst_23 : f32 to vector<32x16xf32>
    %67 = arith.subf %65, %66 : vector<32x16xf32>
    %68 = arith.select %62, %60, %67 : vector<32x16xi1>, vector<32x16xf32>
    %69 = tpu.concatenate %49, %68 in 1 : vector<32x16xf32>, vector<32x16xf32> -> vector<32x32xf32>
    %cst_24 = arith.constant 0.000000e+00 : f32
    %70 = vector.broadcast %cst_24 : f32 to vector<32x96xf32>
    %71 = tpu.concatenate %69, %70 in 1 : vector<32x32xf32>, vector<32x96xf32> -> vector<32x128xf32>
    %72 = arith.truncf %71 : vector<32x128xf32> to vector<32x128xbf16>
    %c0_25 = arith.constant 0 : index
    %c0_26 = arith.constant 0 : index
    %73 = vector.load %arg5[%c0_25, %c0_26] : memref<32x128xbf16, #tpu.memory_space<vmem>>, vector<32x128xbf16>
    tpu.vector_store %arg5[%c0_25, %c0_26], %72 {strides = array<i32>} : memref<32x128xbf16, #tpu.memory_space<vmem>>, vector<32x128xbf16>,
    return
  }
  func.func @transform_0(%arg0: i32) -> (i32, i32) {
    %c0_i32 = arith.constant 0 : i32
    %c0_i32_0 = arith.constant 0 : i32
    %c0_i32_1 = arith.constant 0 : i32
    return %c0_i32, %c0_i32_0 : i32, i32
  }
  func.func @transform_1(%arg0: i32) -> (i32, i32, i32) {
    %c0_i32 = arith.constant 0 : i32
    %c0_i32_0 = arith.constant 0 : i32
    %c0_i32_1 = arith.constant 0 : i32
    %c0_i32_2 = arith.constant 0 : i32
    return %c0_i32, %c0_i32_0, %c0_i32_1 : i32, i32, i32
  }
  func.func @transform_2(%arg0: i32) -> (i32, i32, i32) {
    %c0_i32 = arith.constant 0 : i32
    %c0_i32_0 = arith.constant 0 : i32
    %c0_i32_1 = arith.constant 0 : i32
    return %c0_i32, %arg0, %c0_i32_0 : i32, i32, i32
  }
  func.func @transform_3(%arg0: i32) -> (i32, i32) {
    %c0_i32 = arith.constant 0 : i32
    %c0_i32_0 = arith.constant 0 : i32
    return %arg0, %c0_i32 : i32, i32
  }
  func.func @transform_4(%arg0: i32) -> (i32, i32) {
    %c0_i32 = arith.constant 0 : i32
    %c0_i32_0 = arith.constant 0 : i32
    return %arg0, %c0_i32 : i32, i32
  }
}

module attributes {stable_mosaic.version = 11 : i64} {
  func.func @_gat_agg_kernel(%arg0: i32, %arg1: memref<128x256xbf16, #tpu.memory_space<vmem>>, %arg2: memref<2x1x128xf32, #tpu.memory_space<vmem>>, %arg3: memref<2x32x1xf32, #tpu.memory_space<vmem>>, %arg4: memref<32x128xi8, #tpu.memory_space<vmem>>, %arg5: memref<32x128xf32, #tpu.memory_space<vmem>>) attributes {dimension_semantics = [#tpu.dimension_semantics<parallel>], iteration_bounds = array<i64: 1>, scalar_prefetch = 0 : i64, scratch_operands = 0 : i64, tpu.core_type = #tpu.core_type<tc>, window_params = [{pipeline_mode = #tpu.pipeline_mode<synchronous>, transform_indices = @transform_0, window_bounds = array<i64: 128, 256>}, {pipeline_mode = #tpu.pipeline_mode<synchronous>, transform_indices = @transform_1, window_bounds = array<i64: 2, 1, 128>}, {transform_indices = @transform_2, window_bounds = array<i64: 2, 32, 1>}, {transform_indices = @transform_3, window_bounds = array<i64: 32, 128>}, {transform_indices = @transform_4, window_bounds = array<i64: 32, 128>}]} {
    %c0 = arith.constant 0 : index
    %c0_0 = arith.constant 0 : index
    %0 = vector.load %arg4[%c0, %c0_0] : memref<32x128xi8, #tpu.memory_space<vmem>>, vector<32x128xi8>
    %1 = arith.sitofp %0 : vector<32x128xi8> to vector<32x128xf32>
    %cst = arith.constant 0.000000e+00 : f32
    %2 = vector.broadcast %cst : f32 to vector<32x128xf32>
    %3 = arith.cmpf ogt, %1, %2 : vector<32x128xf32>
    %c0_1 = arith.constant 0 : index
    %c0_2 = arith.constant 0 : index
    %c0_3 = arith.constant 0 : index
    %4 = vector.load %arg2[%c0_1, %c0_2, %c0_3] : memref<2x1x128xf32, #tpu.memory_space<vmem>>, vector<2x1x128xf32>
    %c0_4 = arith.constant 0 : index
    %c0_5 = arith.constant 0 : index
    %c0_6 = arith.constant 0 : index
    %5 = vector.load %arg3[%c0_4, %c0_5, %c0_6] : memref<2x32x1xf32, #tpu.memory_space<vmem>>, vector<2x32x1xf32>
    %6 = vector.broadcast %4 : vector<2x1x128xf32> to vector<2x32x128xf32>
    %7 = vector.broadcast %5 : vector<2x32x1xf32> to vector<2x32x128xf32>
    %8 = arith.addf %6, %7 : vector<2x32x128xf32>
    %cst_7 = arith.constant 0.000000e+00 : f32
    %9 = vector.broadcast %cst_7 : f32 to vector<2x32x128xf32>
    %10 = arith.cmpf ogt, %8, %9 : vector<2x32x128xf32>
    %cst_8 = arith.constant 2.000000e-01 : f32
    %11 = vector.broadcast %cst_8 : f32 to vector<2x32x128xf32>
    %12 = arith.mulf %11, %8 : vector<2x32x128xf32>
    %13 = arith.select %10, %8, %12 : vector<2x32x128xi1>, vector<2x32x128xf32>
    %14 = vector.shape_cast %3 : vector<32x128xi1> to vector<1x32x128xi1>
    %cst_9 = arith.constant -1.000000e+30 : f32
    %15 = vector.shape_cast %14 : vector<1x32x128xi1> to vector<1x32x128xi1>
    %16 = vector.broadcast %15 : vector<1x32x128xi1> to vector<2x32x128xi1>
    %17 = vector.broadcast %cst_9 : f32 to vector<2x32x128xf32>
    %18 = arith.select %16, %13, %17 : vector<2x32x128xi1>, vector<2x32x128xf32>
    %cst_10 = arith.constant dense<0xFF800000> : vector<2x32xf32>
    %19 = vector.multi_reduction <maximumf>, %18, %cst_10 [2] : vector<2x32x128xf32> to vector<2x32xf32>
    %20 = vector.shape_cast %19 : vector<2x32xf32> to vector<2x32x1xf32>
    %21 = vector.shape_cast %3 : vector<32x128xi1> to vector<1x32x128xi1>
    %22 = vector.broadcast %20 : vector<2x32x1xf32> to vector<2x32x128xf32>
    %23 = arith.subf %18, %22 : vector<2x32x128xf32>
    %24 = math.exp %23 : vector<2x32x128xf32>
    %cst_11 = arith.constant 0.000000e+00 : f32
    %25 = vector.shape_cast %21 : vector<1x32x128xi1> to vector<1x32x128xi1>
    %26 = vector.broadcast %25 : vector<1x32x128xi1> to vector<2x32x128xi1>
    %27 = vector.broadcast %cst_11 : f32 to vector<2x32x128xf32>
    %28 = arith.select %26, %24, %27 : vector<2x32x128xi1>, vector<2x32x128xf32>
    %29 = arith.truncf %28 : vector<2x32x128xf32> to vector<2x32x128xbf16>
    %c0_12 = arith.constant 0 : index
    %c0_13 = arith.constant 0 : index
    %30 = vector.load %arg1[%c0_12, %c0_13] : memref<128x256xbf16, #tpu.memory_space<vmem>>, vector<128x256xbf16>
    %31 = vector.extract_strided_slice %30 {offsets = [0, 0], sizes = [128, 128], strides = [1, 1]} : vector<128x256xbf16> to vector<128x128xbf16>
    %32 = vector.extract_strided_slice %29 {offsets = [0, 0, 0], sizes = [1, 32, 128], strides = [1, 1, 1]} : vector<2x32x128xbf16> to vector<1x32x128xbf16>
    %33 = vector.shape_cast %32 : vector<1x32x128xbf16> to vector<32x128xbf16>
    %cst_14 = arith.constant dense<0.000000e+00> : vector<32x128xf32>
    %34 = tpu.matmul %33, %31, %cst_14 {dimension_numbers = #tpu.dot_dimension_numbers<[1], [0], [0], [1], [0, 0, 1, 1], [], []>} : vector<32x128xbf16>, vector<128x128xbf16>, vector<32x128xf32> -> vector<32x128xf32>
    %35 = vector.extract_strided_slice %34 {offsets = [0, 8], sizes = [32, 1], strides = [1, 1]} : vector<32x128xf32> to vector<32x1xf32>
    %36 = vector.extract_strided_slice %34 {offsets = [0, 0], sizes = [32, 8], strides = [1, 1]} : vector<32x128xf32> to vector<32x8xf32>
    %cst_15 = arith.constant 9.99999968E-21 : f32
    %37 = vector.broadcast %cst_15 : f32 to vector<32x1xf32>
    %38 = arith.maximumf %35, %37 : vector<32x1xf32>
    %39 = tpu.reciprocal %38 {approx = true} : vector<32x1xf32> -> vector<32x1xf32>
    %40 = vector.broadcast %39 : vector<32x1xf32> to vector<32x8xf32>
    %41 = arith.mulf %36, %40 : vector<32x8xf32>
    %42 = vector.extract_strided_slice %30 {offsets = [0, 128], sizes = [128, 128], strides = [1, 1]} : vector<128x256xbf16> to vector<128x128xbf16>
    %43 = vector.extract_strided_slice %29 {offsets = [1, 0, 0], sizes = [1, 32, 128], strides = [1, 1, 1]} : vector<2x32x128xbf16> to vector<1x32x128xbf16>
    %44 = vector.shape_cast %43 : vector<1x32x128xbf16> to vector<32x128xbf16>
    %cst_16 = arith.constant dense<0.000000e+00> : vector<32x128xf32>
    %45 = tpu.matmul %44, %42, %cst_16 {dimension_numbers = #tpu.dot_dimension_numbers<[1], [0], [0], [1], [0, 0, 1, 1], [], []>} : vector<32x128xbf16>, vector<128x128xbf16>, vector<32x128xf32> -> vector<32x128xf32>
    %46 = vector.extract_strided_slice %45 {offsets = [0, 8], sizes = [32, 1], strides = [1, 1]} : vector<32x128xf32> to vector<32x1xf32>
    %47 = vector.extract_strided_slice %45 {offsets = [0, 0], sizes = [32, 8], strides = [1, 1]} : vector<32x128xf32> to vector<32x8xf32>
    %cst_17 = arith.constant 9.99999968E-21 : f32
    %48 = vector.broadcast %cst_17 : f32 to vector<32x1xf32>
    %49 = arith.maximumf %46, %48 : vector<32x1xf32>
    %50 = tpu.reciprocal %49 {approx = true} : vector<32x1xf32> -> vector<32x1xf32>
    %51 = vector.broadcast %50 : vector<32x1xf32> to vector<32x8xf32>
    %52 = arith.mulf %47, %51 : vector<32x8xf32>
    %53 = arith.addf %41, %52 : vector<32x8xf32>
    %cst_18 = arith.constant 5.000000e-01 : f32
    %54 = vector.broadcast %cst_18 : f32 to vector<32x8xf32>
    %55 = arith.mulf %53, %54 : vector<32x8xf32>
    %cst_19 = arith.constant 0.000000e+00 : f32
    %56 = vector.broadcast %cst_19 : f32 to vector<32x120xf32>
    %57 = tpu.concatenate %55, %56 in 1 : vector<32x8xf32>, vector<32x120xf32> -> vector<32x128xf32>
    %c0_20 = arith.constant 0 : index
    %c0_21 = arith.constant 0 : index
    %58 = vector.load %arg5[%c0_20, %c0_21] : memref<32x128xf32, #tpu.memory_space<vmem>>, vector<32x128xf32>
    tpu.vector_store %arg5[%c0_20, %c0_21], %57 {strides = array<i32>} : memref<32x128xf32, #tpu.memory_space<vmem>>, vector<32x128xf32>,
    return
  }
  func.func @transform_0(%arg0: i32) -> (i32, i32) {
    %c0_i32 = arith.constant 0 : i32
    %c0_i32_0 = arith.constant 0 : i32
    %c0_i32_1 = arith.constant 0 : i32
    return %c0_i32, %c0_i32_0 : i32, i32
  }
  func.func @transform_1(%arg0: i32) -> (i32, i32, i32) {
    %c0_i32 = arith.constant 0 : i32
    %c0_i32_0 = arith.constant 0 : i32
    %c0_i32_1 = arith.constant 0 : i32
    %c0_i32_2 = arith.constant 0 : i32
    return %c0_i32, %c0_i32_0, %c0_i32_1 : i32, i32, i32
  }
  func.func @transform_2(%arg0: i32) -> (i32, i32, i32) {
    %c0_i32 = arith.constant 0 : i32
    %c0_i32_0 = arith.constant 0 : i32
    %c0_i32_1 = arith.constant 0 : i32
    return %c0_i32, %arg0, %c0_i32_0 : i32, i32, i32
  }
  func.func @transform_3(%arg0: i32) -> (i32, i32) {
    %c0_i32 = arith.constant 0 : i32
    %c0_i32_0 = arith.constant 0 : i32
    return %arg0, %c0_i32 : i32, i32
  }
  func.func @transform_4(%arg0: i32) -> (i32, i32) {
    %c0_i32 = arith.constant 0 : i32
    %c0_i32_0 = arith.constant 0 : i32
    return %arg0, %c0_i32 : i32, i32
  }
}

</mosaic_0001>

<llo_original>
// kernel: gat_sampling_forward.6
$region0: #{gat_sampling_forward.6}
  #allocation0 [shape = 'u32[]', space=smem, size = 0x4, offset = 0x4, fixed_abs, tag = 'smem constant byte address 0x4 - core index']
  #allocation1 [shape = 'u32[144,128]{1,0:T(1,128)}', space=vmem, size = 0x12000, scoped, tag = 'internal scratch']
  %s0 = inlined_call_operand.vmem [shape: bf16[128,128], index: 0, kind: input, shape index: {}]
  %s1 = inlined_call_operand.vmem [shape: bf16[128,128], index: 1, kind: input, shape index: {}]
  %s2 = inlined_call_operand.vmem [shape: f32[128,128], index: 2, kind: output, shape index: {}]
  %s3 = sld [smem:[#allocation0]]
  $region18: #{gat_sampling_forward.6} parent=0
    _
  %s5 = ssub.s32 1, %s3
  %s6 = scalar_select 0, %s5, %s3
  // Predicated region
  $region2: #{gat_sampling_forward.6} parent=0 // pred_check
    _
  $region3: #{gat_sampling_forward.6} parent=0 // pred_check_branch
    %8 = sbr.rel (0) target = $region5
  $region4: #{gat_sampling_forward.6} parent=0 // pred_region
    _
  $region5: #{gat_sampling_forward.6} parent=0 // pred_fallthru
    _
  // Predicated region
  $region6: #{gat_sampling_forward.6} parent=0 // pred_check
    _
  $region7: #{gat_sampling_forward.6} parent=0 // pred_check_branch
    %10 = sbr.rel (0) target = $region9
  $region8: #{gat_sampling_forward.6} parent=0 // pred_region
    _
  $region9: #{gat_sampling_forward.6} parent=0 // pred_fallthru
    _
  %v12 = vld [vmem:[%s0] sm:$0xf]
  %v13 = vld [vmem:[%s0 + $0x4] sm:$0xf]
  %v14 = vld [vmem:[%s0 + $0x8] sm:$0xf]
  %v15 = vld [vmem:[%s0 + $0xc] sm:$0xf]
  %v16 = vld [vmem:[%s0 + $0x10] sm:$0xf]
  %v17 = vld [vmem:[%s0 + $0x14] sm:$0xf]
  %v18 = vld [vmem:[%s0 + $0x18] sm:$0xf]
  %v19 = vld [vmem:[%s0 + $0x1c] sm:$0xf]
  %v20 = vld [vmem:[%s0 + $0x20] sm:$0xf]
  %v21 = vld [vmem:[%s0 + $0x24] sm:$0xf]
  %v22 = vld [vmem:[%s0 + $0x28] sm:$0xf]
  %v23 = vld [vmem:[%s0 + $0x2c] sm:$0xf]
  %v24 = vld [vmem:[%s0 + $0x30] sm:$0xf]
  %v25 = vld [vmem:[%s0 + $0x34] sm:$0xf]
  %v26 = vld [vmem:[%s0 + $0x38] sm:$0xf]
  %v27 = vld [vmem:[%s0 + $0x3c] sm:$0xf]
  %v28 = vld [vmem:[%s1] sm:$0xf]
  %v29 = vld [vmem:[%s1 + $0x4] sm:$0xf]
  %v30 = vld [vmem:[%s1 + $0x8] sm:$0xf]
  %v31 = vld [vmem:[%s1 + $0xc] sm:$0xf]
  %v32 = vld [vmem:[%s1 + $0x10] sm:$0xf]
  %v33 = vld [vmem:[%s1 + $0x14] sm:$0xf]
  %v34 = vld [vmem:[%s1 + $0x18] sm:$0xf]
  %v35 = vld [vmem:[%s1 + $0x1c] sm:$0xf]
  %v36 = vld [vmem:[%s1 + $0x20] sm:$0xf]
  %v37 = vld [vmem:[%s1 + $0x24] sm:$0xf]
  %v38 = vld [vmem:[%s1 + $0x28] sm:$0xf]
  %v39 = vld [vmem:[%s1 + $0x2c] sm:$0xf]
  %v40 = vld [vmem:[%s1 + $0x30] sm:$0xf]
  %v41 = vld [vmem:[%s1 + $0x34] sm:$0xf]
  %v42 = vld [vmem:[%s1 + $0x38] sm:$0xf]
  %v43 = vld [vmem:[%s1 + $0x3c] sm:$0xf]
  %v60 = vunpack.c.l.b16 %v12
  %v61 = vunpack.c.l.b16 %v13
  %v62 = vunpack.c.l.b16 %v14
  %v63 = vunpack.c.l.b16 %v15
  %v64 = vunpack.c.l.b16 %v16
  %v65 = vunpack.c.l.b16 %v17
  %v66 = vunpack.c.l.b16 %v18
  %v67 = vunpack.c.l.b16 %v19
  %v68 = vunpack.c.l.b16 %v20
  %v69 = vunpack.c.l.b16 %v21
  %v70 = vunpack.c.l.b16 %v22
  %v71 = vunpack.c.l.b16 %v23
  %v72 = vunpack.c.l.b16 %v24
  %v73 = vunpack.c.l.b16 %v25
  %v74 = vunpack.c.l.b16 %v26
  %v75 = vunpack.c.l.b16 %v27
  %v76 = vpack.c.b16 %v61, %v60
  %v77 = vpack.c.b16 %v63, %v62
  %v78 = vpack.c.b16 %v65, %v64
  %v79 = vpack.c.b16 %v67, %v66
  %v80 = vpack.c.b16 %v69, %v68
  %v81 = vpack.c.b16 %v71, %v70
  %v82 = vpack.c.b16 %v73, %v72
  %v83 = vpack.c.b16 %v75, %v74
  %v108 = vunpack.c.l.b16 %v28
  %v109 = vunpack.c.l.b16 %v29
  %v110 = vunpack.c.l.b16 %v30
  %v111 = vunpack.c.l.b16 %v31
  %v112 = vunpack.c.l.b16 %v32
  %v113 = vunpack.c.l.b16 %v33
  %v114 = vunpack.c.l.b16 %v34
  %v115 = vunpack.c.l.b16 %v35
  %v116 = vunpack.c.l.b16 %v36
  %v117 = vunpack.c.l.b16 %v37
  %v118 = vunpack.c.l.b16 %v38
  %v119 = vunpack.c.l.b16 %v39
  %v120 = vunpack.c.l.b16 %v40
  %v121 = vunpack.c.l.b16 %v41
  %v122 = vunpack.c.l.b16 %v42
  %v123 = vunpack.c.l.b16 %v43
  %v124 = vpack.c.b16 %v109, %v108
  %v125 = vpack.c.b16 %v111, %v110
  %v126 = vpack.c.b16 %v113, %v112
  %v127 = vpack.c.b16 %v115, %v114
  %v128 = vpack.c.b16 %v117, %v116
  %v129 = vpack.c.b16 %v119, %v118
  %v130 = vpack.c.b16 %v121, %v120
  %v131 = vpack.c.b16 %v123, %v122
  %140 = vmatprep.subr.bf16.mxu0 0
  %141 = vmatpush1.bf16.msra.mxu0 %v131
  %142 = vmatprep.subr.bf16.mxu0 0
  %143 = vmatpush1.bf16.msra.mxu0 %v130
  %144 = vmatprep.subr.bf16.mxu0 0
  %145 = vmatpush1.bf16.msra.mxu0 %v129
  %146 = vmatprep.subr.bf16.mxu0 0
  %147 = vmatpush1.bf16.msra.mxu0 %v128
  %148 = vmatprep.subr.bf16.mxu0 0
  %149 = vmatpush1.bf16.msra.mxu0 %v127
  %150 = vmatprep.subr.bf16.mxu0 0
  %151 = vmatpush1.bf16.msra.mxu0 %v126
  %152 = vmatprep.subr.bf16.mxu0 0
  %153 = vmatpush1.bf16.msra.mxu0 %v125
  %154 = vmatprep.subr.bf16.mxu0 0
  %155 = vmatpush1.bf16.msra.mxu0 %v124
  %156 = vmatprep.subr.bf16.mxu0 0
  %157 = vmatpush2.bf16.msra.mxu0 0
  %158 = vmatprep.subr.bf16.mxu0 0
  %159 = vmatpush2.bf16.msra.mxu0 0
  %160 = vmatprep.subr.bf16.mxu0 0
  %161 = vmatpush2.bf16.msra.mxu0 0
  %162 = vmatprep.subr.bf16.mxu0 0
  %163 = vmatpush2.bf16.msra.mxu0 0
  %164 = vmatprep.subr.bf16.mxu0 0
  %165 = vmatpush2.bf16.msra.mxu0 0
  %166 = vmatprep.subr.bf16.mxu0 0
  %167 = vmatpush2.bf16.msra.mxu0 0
  %168 = vmatprep.subr.bf16.mxu0 0
  %169 = vmatpush2.bf16.msra.mxu0 0
  %170 = vmatprep.subr.bf16.mxu0 0
  %171 = vmatpush2.bf16.msra.mxu0 0
  %172 = vmatprep.mubr.bf16.mxu0 0
  %173 = vmatmul.mubr.bf16.gmra.mxu0 %v76
  %v174 = vpop.f32.mrf.mxu0
  %v175 = vadd.f32 0.0, %v174
  %v176 = vpop.f32.mrf.mxu0
  %v177 = vpop.f32.mrf.mxu0
  %v178 = vadd.f32 0.0, %v177
  %v179 = vpop.f32.mrf.mxu0
  %180 = vmatprep.mubr.bf16.mxu0 0
  %181 = vmatmul.mubr.bf16.gmra.mxu0 %v77
  %v182 = vpop.f32.mrf.mxu0
  %v183 = vadd.f32 0.0, %v182
  %v184 = vpop.f32.mrf.mxu0
  %v185 = vpop.f32.mrf.mxu0
  %v186 = vadd.f32 0.0, %v185
  %v187 = vpop.f32.mrf.mxu0
  %188 = vmatprep.mubr.bf16.mxu0 0
  %189 = vmatmul.mubr.bf16.gmra.mxu0 %v78
  %v190 = vpop.f32.mrf.mxu0
  %v191 = vadd.f32 0.0, %v190
  %v192 = vpop.f32.mrf.mxu0
  %v193 = vpop.f32.mrf.mxu0
  %v194 = vadd.f32 0.0, %v193
  %v195 = vpop.f32.mrf.mxu0
  %196 = vmatprep.mubr.bf16.mxu0 0
  %197 = vmatmul.mubr.bf16.gmra.mxu0 %v79
  %v198 = vpop.f32.mrf.mxu0
  %v199 = vadd.f32 0.0, %v198
  %v200 = vpop.f32.mrf.mxu0
  %v201 = vpop.f32.mrf.mxu0
  %v202 = vadd.f32 0.0, %v201
  %v203 = vpop.f32.mrf.mxu0
  %204 = vmatprep.mubr.bf16.mxu0 0
  %205 = vmatmul.mubr.bf16.gmra.mxu0 %v80
  %v206 = vpop.f32.mrf.mxu0
  %v207 = vadd.f32 0.0, %v206
  %v208 = vpop.f32.mrf.mxu0
  %v209 = vpop.f32.mrf.mxu0
  %v210 = vadd.f32 0.0, %v209
  %v211 = vpop.f32.mrf.mxu0
  %212 = vmatprep.mubr.bf16.mxu0 0
  %213 = vmatmul.mubr.bf16.gmra.mxu0 %v81
  %v214 = vpop.f32.mrf.mxu0
  %v215 = vadd.f32 0.0, %v214
  %v216 = vpop.f32.mrf.mxu0
  %v217 = vpop.f32.mrf.mxu0
  %v218 = vadd.f32 0.0, %v217
  %v219 = vpop.f32.mrf.mxu0
  %220 = vmatprep.mubr.bf16.mxu0 0
  %221 = vmatmul.mubr.bf16.gmra.mxu0 %v82
  %v222 = vpop.f32.mrf.mxu0
  %v223 = vadd.f32 0.0, %v222
  %v224 = vpop.f32.mrf.mxu0
  %v225 = vpop.f32.mrf.mxu0
  %v226 = vadd.f32 0.0, %v225
  %v227 = vpop.f32.mrf.mxu0
  %228 = vmatprep.mubr.bf16.mxu0 0
  %229 = vmatmul.mubr.bf16.gmra.mxu0 %v83
  %v230 = vpop.f32.mrf.mxu0
  %v231 = vadd.f32 0.0, %v230
  %v232 = vpop.f32.mrf.mxu0
  %v233 = vpop.f32.mrf.mxu0
  %v234 = vadd.f32 0.0, %v233
  %v235 = vpop.f32.mrf.mxu0
  %236 = vdwg.mxu0
  %237 = vst [vmem:[%s2] sm:$0xff] %v175
  %238 = vst [vmem:[%s2 + $0x8] sm:$0xff] %v178
  %239 = vst [vmem:[%s2 + $0x10] sm:$0xff] %v183
  %240 = vst [vmem:[%s2 + $0x18] sm:$0xff] %v186
  %241 = vst [vmem:[%s2 + $0x20] sm:$0xff] %v191
  %242 = vst [vmem:[%s2 + $0x28] sm:$0xff] %v194
  %243 = vst [vmem:[%s2 + $0x30] sm:$0xff] %v199
  %244 = vst [vmem:[%s2 + $0x38] sm:$0xff] %v202
  %245 = vst [vmem:[%s2 + $0x40] sm:$0xff] %v207
  %246 = vst [vmem:[%s2 + $0x48] sm:$0xff] %v210
  %247 = vst [vmem:[%s2 + $0x50] sm:$0xff] %v215
  %248 = vst [vmem:[%s2 + $0x58] sm:$0xff] %v218
  %249 = vst [vmem:[%s2 + $0x60] sm:$0xff] %v223
  %250 = vst [vmem:[%s2 + $0x68] sm:$0xff] %v226
  %251 = vst [vmem:[%s2 + $0x70] sm:$0xff] %v231
  %252 = vst [vmem:[%s2 + $0x78] sm:$0xff] %v234
  // Predicated region
  $region10: #{gat_sampling_forward.6} parent=0 // pred_check
    _
  $region11: #{gat_sampling_forward.6} parent=0 // pred_check_branch
    %254 = sbr.rel (0) target = $region13
  $region12: #{gat_sampling_forward.6} parent=0 // pred_region
    _
  $region13: #{gat_sampling_forward.6} parent=0 // pred_fallthru
    _
  // Predicated region
  $region14: #{gat_sampling_forward.6} parent=0 // pred_check
    _
  $region15: #{gat_sampling_forward.6} parent=0 // pred_check_branch
    %256 = sbr.rel (0) target = $region17
  $region16: #{gat_sampling_forward.6} parent=0 // pred_region
    _
  $region17: #{gat_sampling_forward.6} parent=0 // pred_fallthru
    _

// kernel: gat_sampling_forward.7
$region0: #{gat_sampling_forward.7}
  #allocation0 [shape = 'u32[]', space=smem, size = 0x4, offset = 0x4, fixed_abs, tag = 'smem constant byte address 0x4 - core index']
  #allocation1 [shape = 'u32[144,128]{1,0:T(1,128)}', space=vmem, size = 0x12000, scoped, tag = 'internal scratch']
  %s0 = inlined_call_operand.vmem [shape: bf16[128,256], index: 0, kind: input, shape index: {}]
  %s1 = inlined_call_operand.vmem [shape: f32[2,1,128], index: 1, kind: input, shape index: {}]
  %s2 = inlined_call_operand.vmem [shape: f32[2,32,1], index: 2, kind: input, shape index: {}]
  %s3 = inlined_call_operand.vmem [shape: s8[32,128], index: 3, kind: input, shape index: {}]
  %s4 = inlined_call_operand.vmem [shape: bf16[32,128], index: 4, kind: output, shape index: {}]
  %s5 = sld [smem:[#allocation0]]
  $region26: #{gat_sampling_forward.7} parent=0
    _
  %s7 = ssub.s32 1, %s5
  %s8 = scalar_select 0, %s7, %s5
  // Predicated region
  $region2: #{gat_sampling_forward.7} parent=0 // pred_check
    _
  $region3: #{gat_sampling_forward.7} parent=0 // pred_check_branch
    %10 = sbr.rel (0) target = $region5
  $region4: #{gat_sampling_forward.7} parent=0 // pred_region
    _
  $region5: #{gat_sampling_forward.7} parent=0 // pred_fallthru
    _
  // Predicated region
  $region6: #{gat_sampling_forward.7} parent=0 // pred_check
    _
  $region7: #{gat_sampling_forward.7} parent=0 // pred_check_branch
    %12 = sbr.rel (0) target = $region9
  $region8: #{gat_sampling_forward.7} parent=0 // pred_region
    _
  $region9: #{gat_sampling_forward.7} parent=0 // pred_fallthru
    _
  // Predicated region
  $region10: #{gat_sampling_forward.7} parent=0 // pred_check
    _
  $region11: #{gat_sampling_forward.7} parent=0 // pred_check_branch
    %14 = sbr.rel (0) target = $region13
  $region12: #{gat_sampling_forward.7} parent=0 // pred_region
    _
  $region13: #{gat_sampling_forward.7} parent=0 // pred_fallthru
    _
  // Predicated region
  $region14: #{gat_sampling_forward.7} parent=0 // pred_check
    _
  $region15: #{gat_sampling_forward.7} parent=0 // pred_check_branch
    %16 = sbr.rel (0) target = $region17
  $region16: #{gat_sampling_forward.7} parent=0 // pred_region
    _
  $region17: #{gat_sampling_forward.7} parent=0 // pred_fallthru
    _
  %v18 = vld [vmem:[%s3] sm:$0xff]
  %v19 = vunpack.c.0.s8 %v18
  %v20 = vunpack.c.1.s8 %v18
  %v21 = vunpack.c.2.s8 %v18
  %v22 = vunpack.c.3.s8 %v18
  %v23 = vcvt.s32.f32 %v19
  %v24 = vcvt.s32.f32 %v20
  %v25 = vcvt.s32.f32 %v21
  %v26 = vcvt.s32.f32 %v22
  %vm27 = vcmp.gt.f32.partialorder %v23, 0.0
  %vm28 = vcmp.gt.f32.partialorder %v24, 0.0
  %vm29 = vcmp.gt.f32.partialorder %v25, 0.0
  %vm30 = vcmp.gt.f32.partialorder %v26, 0.0
  %v31 = vld [vmem:[%s1] sm:$0x1]
  %v32 = vld [vmem:[%s1 + $0x1] sm:$0x1]
  %v33 = vld [vmem:[%s2] sm:$0xff]
  %v34 = vld [vmem:[%s2 + $0x8] sm:$0xff]
  %v35 = vld [vmem:[%s2 + $0x10] sm:$0xff]
  %v36 = vld [vmem:[%s2 + $0x18] sm:$0xff]
  %v37 = vld [vmem:[%s2 + $0x20] sm:$0xff]
  %v38 = vld [vmem:[%s2 + $0x28] sm:$0xff]
  %v39 = vld [vmem:[%s2 + $0x30] sm:$0xff]
  %v40 = vld [vmem:[%s2 + $0x38] sm:$0xff]
  %v43 = vlaneseq
  %v44 = vshrl.u32 %v43, 7
  %v45 = vsub.s32 0, %v44
  %v46 = vrot.slane %v31, %v45
  %v47 = vlaneseq
  %v48 = vshrl.u32 %v47, 7
  %v49 = vsub.s32 0, %v48
  %v50 = vrot.slane %v32, %v49
  %54 = vset.pattern.permute.xlu0 0
  %55 = vperm.xlu0 %54, %v33
  %v56 = vpop.permute.xlu0 %55
  %59 = vset.pattern.permute.xlu0 0
  %60 = vperm.xlu0 %59, %v34
  %v61 = vpop.permute.xlu0 %60
  %64 = vset.pattern.permute.xlu0 0
  %65 = vperm.xlu0 %64, %v35
  %v66 = vpop.permute.xlu0 %65
  %69 = vset.pattern.permute.xlu0 0
  %70 = vperm.xlu0 %69, %v36
  %v71 = vpop.permute.xlu0 %70
  %74 = vset.pattern.permute.xlu0 0
  %75 = vperm.xlu0 %74, %v37
  %v76 = vpop.permute.xlu0 %75
  %79 = vset.pattern.permute.xlu0 0
  %80 = vperm.xlu0 %79, %v38
  %v81 = vpop.permute.xlu0 %80
  %84 = vset.pattern.permute.xlu0 0
  %85 = vperm.xlu0 %84, %v39
  %v86 = vpop.permute.xlu0 %85
  %89 = vset.pattern.permute.xlu0 0
  %90 = vperm.xlu0 %89, %v40
  %v91 = vpop.permute.xlu0 %90
  %v93 = vadd.f32 %v46, %v56
  %v94 = vadd.f32 %v46, %v61
  %v95 = vadd.f32 %v46, %v66
  %v96 = vadd.f32 %v46, %v71
  %v97 = vadd.f32 %v50, %v76
  %v98 = vadd.f32 %v50, %v81
  %v99 = vadd.f32 %v50, %v86
  %v100 = vadd.f32 %v50, %v91
  %vm101 = vcmp.gt.f32.partialorder %v93, 0.0
  %vm102 = vcmp.gt.f32.partialorder %v94, 0.0
  %vm103 = vcmp.gt.f32.partialorder %v95, 0.0
  %vm104 = vcmp.gt.f32.partialorder %v96, 0.0
  %vm105 = vcmp.gt.f32.partialorder %v97, 0.0
  %vm106 = vcmp.gt.f32.partialorder %v98, 0.0
  %vm107 = vcmp.gt.f32.partialorder %v99, 0.0
  %vm108 = vcmp.gt.f32.partialorder %v100, 0.0
  %v109 = vmul.f32 %v93, 0.2
  %v110 = vmul.f32 %v94, 0.2
  %v111 = vmul.f32 %v95, 0.2
  %v112 = vmul.f32 %v96, 0.2
  %v113 = vmul.f32 %v97, 0.2
  %v114 = vmul.f32 %v98, 0.2
  %v115 = vmul.f32 %v99, 0.2
  %v116 = vmul.f32 %v100, 0.2
  %v117 = vsel %vm101, %v93, %v109
  %v118 = vsel %vm102, %v94, %v110
  %v119 = vsel %vm103, %v95, %v111
  %v120 = vsel %vm104, %v96, %v112
  %v121 = vsel %vm105, %v97, %v113
  %v122 = vsel %vm106, %v98, %v114
  %v123 = vsel %vm107, %v99, %v115
  %v124 = vsel %vm108, %v100, %v116
  %v125 = vsel %vm27, 1, 0
  %v126 = vsel %vm28, 1, 0
  %v127 = vsel %vm29, 1, 0
  %v128 = vsel %vm30, 1, 0
  %vm129 = vcmp.eq.s32.totalorder %v125, 1
  %vm130 = vcmp.eq.s32.totalorder %v126, 1
  %vm131 = vcmp.eq.s32.totalorder %v127, 1
  %vm132 = vcmp.eq.s32.totalorder %v128, 1
  %v133 = vsel %vm129, %v117, -1e+30
  %v134 = vsel %vm130, %v118, -1e+30
  %v135 = vsel %vm131, %v119, -1e+30
  %v136 = vsel %vm132, %v120, -1e+30
  %v137 = vsel %vm129, %v121, -1e+30
  %v138 = vsel %vm130, %v122, -1e+30
  %v139 = vsel %vm131, %v123, -1e+30
  %v140 = vsel %vm132, %v124, -1e+30
  %141 = vmax.xlane.f32.xlu0 %v133
  %v142 = vpop.xlane.xlu0 %141
  %143 = vmax.xlane.f32.xlu0 %v134
  %v144 = vpop.xlane.xlu0 %143
  %145 = vmax.xlane.f32.xlu0 %v135
  %v146 = vpop.xlane.xlu0 %145
  %147 = vmax.xlane.f32.xlu0 %v136
  %v148 = vpop.xlane.xlu0 %147
  %149 = vmax.xlane.f32.xlu0 %v137
  %v150 = vpop.xlane.xlu0 %149
  %151 = vmax.xlane.f32.xlu0 %v138
  %v152 = vpop.xlane.xlu0 %151
  %153 = vmax.xlane.f32.xlu0 %v139
  %v154 = vpop.xlane.xlu0 %153
  %155 = vmax.xlane.f32.xlu0 %v140
  %v156 = vpop.xlane.xlu0 %155
  %v157 = vsub.f32 %v133, %v142
  %v158 = vsub.f32 %v134, %v144
  %v159 = vsub.f32 %v135, %v146
  %v160 = vsub.f32 %v136, %v148
  %v161 = vsub.f32 %v137, %v150
  %v162 = vsub.f32 %v138, %v152
  %v163 = vsub.f32 %v139, %v154
  %v164 = vsub.f32 %v140, %v156
  %v165 = vmul.f32 %v157, 1.442695
  %v166 = vpow.pop %v165
  %v167 = vmul.f32 %v158, 1.442695
  %v168 = vpow.pop %v167
  %v169 = vmul.f32 %v159, 1.442695
  %v170 = vpow.pop %v169
  %v171 = vmul.f32 %v160, 1.442695
  %v172 = vpow.pop %v171
  %v173 = vmul.f32 %v161, 1.442695
  %v174 = vpow.pop %v173
  %v175 = vmul.f32 %v162, 1.442695
  %v176 = vpow.pop %v175
  %v177 = vmul.f32 %v163, 1.442695
  %v178 = vpow.pop %v177
  %v179 = vmul.f32 %v164, 1.442695
  %v180 = vpow.pop %v179
  %v181 = vsel %vm129, %v166, 0.0
  %v182 = vsel %vm130, %v168, 0.0
  %v183 = vsel %vm131, %v170, 0.0
  %v184 = vsel %vm132, %v172, 0.0
  %v185 = vsel %vm129, %v174, 0.0
  %v186 = vsel %vm130, %v176, 0.0
  %v187 = vsel %vm131, %v178, 0.0
  %v188 = vsel %vm132, %v180, 0.0
  %v189 = vpack.c.bf16 %v182, %v181
  %v190 = vpack.c.bf16 %v184, %v183
  %v191 = vpack.c.bf16 %v186, %v185
  %v192 = vpack.c.bf16 %v188, %v187
  %v193 = vld [vmem:[%s0] sm:$0xff]
  %v194 = vld [vmem:[%s0 + $0x8] sm:$0xff]
  %v195 = vld [vmem:[%s0 + $0x10] sm:$0xff]
  %v196 = vld [vmem:[%s0 + $0x18] sm:$0xff]
  %v197 = vld [vmem:[%s0 + $0x20] sm:$0xff]
  %v198 = vld [vmem:[%s0 + $0x28] sm:$0xff]
  %v199 = vld [vmem:[%s0 + $0x30] sm:$0xff]
  %v200 = vld [vmem:[%s0 + $0x38] sm:$0xff]
  %v201 = vld [vmem:[%s0 + $0x40] sm:$0xff]
  %v202 = vld [vmem:[%s0 + $0x48] sm:$0xff]
  %v203 = vld [vmem:[%s0 + $0x50] sm:$0xff]
  %v204 = vld [vmem:[%s0 + $0x58] sm:$0xff]
  %v205 = vld [vmem:[%s0 + $0x60] sm:$0xff]
  %v206 = vld [vmem:[%s0 + $0x68] sm:$0xff]
  %v207 = vld [vmem:[%s0 + $0x70] sm:$0xff]
  %v208 = vld [vmem:[%s0 + $0x78] sm:$0xff]
  %v225 = vunpack.c.l.b16 %v193
  %v226 = vunpack.c.l.b16 %v194
  %v227 = vunpack.c.l.b16 %v195
  %v228 = vunpack.c.l.b16 %v196
  %v229 = vunpack.c.l.b16 %v197
  %v230 = vunpack.c.l.b16 %v198
  %v231 = vunpack.c.l.b16 %v199
  %v232 = vunpack.c.l.b16 %v200
  %v233 = vunpack.c.l.b16 %v201
  %v234 = vunpack.c.l.b16 %v202
  %v235 = vunpack.c.l.b16 %v203
  %v236 = vunpack.c.l.b16 %v204
  %v237 = vunpack.c.l.b16 %v205
  %v238 = vunpack.c.l.b16 %v206
  %v239 = vunpack.c.l.b16 %v207
  %v240 = vunpack.c.l.b16 %v208
  %v241 = vpack.c.b16 %v226, %v225
  %v242 = vpack.c.b16 %v228, %v227
  %v243 = vpack.c.b16 %v230, %v229
  %v244 = vpack.c.b16 %v232, %v231
  %v245 = vpack.c.b16 %v234, %v233
  %v246 = vpack.c.b16 %v236, %v235
  %v247 = vpack.c.b16 %v238, %v237
  %v248 = vpack.c.b16 %v240, %v239
  %257 = vmatprep.subr.bf16.mxu0 0
  %258 = vmatpush1.bf16.msra.mxu0 %v248
  %259 = vmatprep.subr.bf16.mxu0 0
  %260 = vmatpush1.bf16.msra.mxu0 %v247
  %261 = vmatprep.subr.bf16.mxu0 0
  %262 = vmatpush1.bf16.msra.mxu0 %v246
  %263 = vmatprep.subr.bf16.mxu0 0
  %264 = vmatpush1.bf16.msra.mxu0 %v245
  %265 = vmatprep.subr.bf16.mxu0 0
  %266 = vmatpush1.bf16.msra.mxu0 %v244
  %267 = vmatprep.subr.bf16.mxu0 0
  %268 = vmatpush1.bf16.msra.mxu0 %v243
  %269 = vmatprep.subr.bf16.mxu0 0
  %270 = vmatpush1.bf16.msra.mxu0 %v242
  %271 = vmatprep.subr.bf16.mxu0 0
  %272 = vmatpush1.bf16.msra.mxu0 %v241
  %273 = vmatprep.subr.bf16.mxu0 0
  %274 = vmatpush2.bf16.msra.mxu0 0
  %275 = vmatprep.subr.bf16.mxu0 0
  %276 = vmatpush2.bf16.msra.mxu0 0
  %277 = vmatprep.subr.bf16.mxu0 0
  %278 = vmatpush2.bf16.msra.mxu0 0
  %279 = vmatprep.subr.bf16.mxu0 0
  %280 = vmatpush2.bf16.msra.mxu0 0
  %281 = vmatprep.subr.bf16.mxu0 0
  %282 = vmatpush2.bf16.msra.mxu0 0
  %283 = vmatprep.subr.bf16.mxu0 0
  %284 = vmatpush2.bf16.msra.mxu0 0
  %285 = vmatprep.subr.bf16.mxu0 0
  %286 = vmatpush2.bf16.msra.mxu0 0
  %287 = vmatprep.subr.bf16.mxu0 0
  %288 = vmatpush2.bf16.msra.mxu0 0
  %289 = vmatprep.mubr.bf16.mxu0 0
  %290 = vmatmul.mubr.bf16.gmra.mxu0 %v189
  %v291 = vpop.f32.mrf.mxu0
  %v292 = vadd.f32 0.0, %v291
  %v293 = vpop.f32.mrf.mxu0
  %v294 = vpop.f32.mrf.mxu0
  %v295 = vadd.f32 0.0, %v294
  %v296 = vpop.f32.mrf.mxu0
  %297 = vmatprep.mubr.bf16.mxu0 0
  %298 = vmatmul.mubr.bf16.gmra.mxu0 %v190
  %v299 = vpop.f32.mrf.mxu0
  %v300 = vadd.f32 0.0, %v299
  %v301 = vpop.f32.mrf.mxu0
  %v302 = vpop.f32.mrf.mxu0
  %v303 = vadd.f32 0.0, %v302
  %v304 = vpop.f32.mrf.mxu0
  %305 = vdwg.mxu0
  %v306 = vmax.f32 %v292, 1e-20
  %v307 = vmax.f32 %v295, 1e-20
  %v308 = vmax.f32 %v300, 1e-20
  %v309 = vmax.f32 %v303, 1e-20
  %v310 = vrcp.pop %v306
  %v311 = vrcp.pop %v307
  %v312 = vrcp.pop %v308
  %v313 = vrcp.pop %v309
  %315 = vset.pattern.permute.xlu0 16
  %316 = vperm.xlu0 %315, %v310
  %v317 = vpop.permute.xlu0 %316
  %320 = vset.pattern.permute.xlu0 16
  %321 = vperm.xlu0 %320, %v311
  %v322 = vpop.permute.xlu0 %321
  %325 = vset.pattern.permute.xlu0 16
  %326 = vperm.xlu0 %325, %v312
  %v327 = vpop.permute.xlu0 %326
  %330 = vset.pattern.permute.xlu0 16
  %331 = vperm.xlu0 %330, %v313
  %v332 = vpop.permute.xlu0 %331
  %v334 = vmul.f32 %v292, %v317
  %v335 = vmul.f32 %v295, %v322
  %v336 = vmul.f32 %v300, %v327
  %v337 = vmul.f32 %v303, %v332
  %vm338 = vcmp.gt.f32.partialorder %v334, 0.0
  %vm339 = vcmp.gt.f32.partialorder %v335, 0.0
  %vm340 = vcmp.gt.f32.partialorder %v336, 0.0
  %vm341 = vcmp.gt.f32.partialorder %v337, 0.0
  %v342 = vmin.f32 %v334, 0.0
  %v343 = vmin.f32 %v335, 0.0
  %v344 = vmin.f32 %v336, 0.0
  %v345 = vmin.f32 %v337, 0.0
  %v346 = vmul.f32 %v342, 1.442695
  %v347 = vpow.pop %v346
  %v348 = vmul.f32 %v343, 1.442695
  %v349 = vpow.pop %v348
  %v350 = vmul.f32 %v344, 1.442695
  %v351 = vpow.pop %v350
  %v352 = vmul.f32 %v345, 1.442695
  %v353 = vpow.pop %v352
  %v354 = vsub.f32 %v347, 1.0
  %v355 = vsub.f32 %v349, 1.0
  %v356 = vsub.f32 %v351, 1.0
  %v357 = vsub.f32 %v353, 1.0
  %v358 = vsel %vm338, %v334, %v354
  %v359 = vsel %vm339, %v335, %v355
  %v360 = vsel %vm340, %v336, %v356
  %v361 = vsel %vm341, %v337, %v357
  %v362 = vunpack.c.h.b16 %v193
  %v363 = vunpack.c.h.b16 %v194
  %v364 = vunpack.c.h.b16 %v195
  %v365 = vunpack.c.h.b16 %v196
  %v366 = vunpack.c.h.b16 %v197
  %v367 = vunpack.c.h.b16 %v198
  %v368 = vunpack.c.h.b16 %v199
  %v369 = vunpack.c.h.b16 %v200
  %v370 = vunpack.c.h.b16 %v201
  %v371 = vunpack.c.h.b16 %v202
  %v372 = vunpack.c.h.b16 %v203
  %v373 = vunpack.c.h.b16 %v204
  %v374 = vunpack.c.h.b16 %v205
  %v375 = vunpack.c.h.b16 %v206
  %v376 = vunpack.c.h.b16 %v207
  %v377 = vunpack.c.h.b16 %v208
  %v378 = vpack.c.b16 %v363, %v362
  %v379 = vpack.c.b16 %v365, %v364
  %v380 = vpack.c.b16 %v367, %v366
  %v381 = vpack.c.b16 %v369, %v368
  %v382 = vpack.c.b16 %v371, %v370
  %v383 = vpack.c.b16 %v373, %v372
  %v384 = vpack.c.b16 %v375, %v374
  %v385 = vpack.c.b16 %v377, %v376
  %394 = vmatprep.subr.bf16.mxu0 0
  %395 = vmatpush1.bf16.msra.mxu0 %v385
  %396 = vmatprep.subr.bf16.mxu0 0
  %397 = vmatpush1.bf16.msra.mxu0 %v384
  %398 = vmatprep.subr.bf16.mxu0 0
  %399 = vmatpush1.bf16.msra.mxu0 %v383
  %400 = vmatprep.subr.bf16.mxu0 0
  %401 = vmatpush1.bf16.msra.mxu0 %v382
  %402 = vmatprep.subr.bf16.mxu0 0
  %403 = vmatpush1.bf16.msra.mxu0 %v381
  %404 = vmatprep.subr.bf16.mxu0 0
  %405 = vmatpush1.bf16.msra.mxu0 %v380
  %406 = vmatprep.subr.bf16.mxu0 0
  %407 = vmatpush1.bf16.msra.mxu0 %v379
  %408 = vmatprep.subr.bf16.mxu0 0
  %409 = vmatpush1.bf16.msra.mxu0 %v378
  %410 = vmatprep.subr.bf16.mxu0 0
  %411 = vmatpush2.bf16.msra.mxu0 0
  %412 = vmatprep.subr.bf16.mxu0 0
  %413 = vmatpush2.bf16.msra.mxu0 0
  %414 = vmatprep.subr.bf16.mxu0 0
  %415 = vmatpush2.bf16.msra.mxu0 0
  %416 = vmatprep.subr.bf16.mxu0 0
  %417 = vmatpush2.bf16.msra.mxu0 0
  %418 = vmatprep.subr.bf16.mxu0 0
  %419 = vmatpush2.bf16.msra.mxu0 0
  %420 = vmatprep.subr.bf16.mxu0 0
  %421 = vmatpush2.bf16.msra.mxu0 0
  %422 = vmatprep.subr.bf16.mxu0 0
  %423 = vmatpush2.bf16.msra.mxu0 0
  %424 = vmatprep.subr.bf16.mxu0 0
  %425 = vmatpush2.bf16.msra.mxu0 0
  %426 = vmatprep.mubr.bf16.mxu0 0
  %427 = vmatmul.mubr.bf16.gmra.mxu0 %v191
  %v428 = vpop.f32.mrf.mxu0
  %v429 = vadd.f32 0.0, %v428
  %v430 = vpop.f32.mrf.mxu0
  %v431 = vpop.f32.mrf.mxu0
  %v432 = vadd.f32 0.0, %v431
  %v433 = vpop.f32.mrf.mxu0
  %434 = vmatprep.mubr.bf16.mxu0 0
  %435 = vmatmul.mubr.bf16.gmra.mxu0 %v192
  %v436 = vpop.f32.mrf.mxu0
  %v437 = vadd.f32 0.0, %v436
  %v438 = vpop.f32.mrf.mxu0
  %v439 = vpop.f32.mrf.mxu0
  %v440 = vadd.f32 0.0, %v439
  %v441 = vpop.f32.mrf.mxu0
  %442 = vdwg.mxu0
  %v443 = vmax.f32 %v429, 1e-20
  %v444 = vmax.f32 %v432, 1e-20
  %v445 = vmax.f32 %v437, 1e-20
  %v446 = vmax.f32 %v440, 1e-20
  %v447 = vrcp.pop %v443
  %v448 = vrcp.pop %v444
  %v449 = vrcp.pop %v445
  %v450 = vrcp.pop %v446
  %452 = vset.pattern.permute.xlu0 16
  %453 = vperm.xlu0 %452, %v447
  %v454 = vpop.permute.xlu0 %453
  %457 = vset.pattern.permute.xlu0 16
  %458 = vperm.xlu0 %457, %v448
  %v459 = vpop.permute.xlu0 %458
  %462 = vset.pattern.permute.xlu0 16
  %463 = vperm.xlu0 %462, %v449
  %v464 = vpop.permute.xlu0 %463
  %467 = vset.pattern.permute.xlu0 16
  %468 = vperm.xlu0 %467, %v450
  %v469 = vpop.permute.xlu0 %468
  %v471 = vmul.f32 %v429, %v454
  %v472 = vmul.f32 %v432, %v459
  %v473 = vmul.f32 %v437, %v464
  %v474 = vmul.f32 %v440, %v469
  %vm475 = vcmp.gt.f32.partialorder %v471, 0.0
  %vm476 = vcmp.gt.f32.partialorder %v472, 0.0
  %vm477 = vcmp.gt.f32.partialorder %v473, 0.0
  %vm478 = vcmp.gt.f32.partialorder %v474, 0.0
  %v479 = vmin.f32 %v471, 0.0
  %v480 = vmin.f32 %v472, 0.0
  %v481 = vmin.f32 %v473, 0.0
  %v482 = vmin.f32 %v474, 0.0
  %v483 = vmul.f32 %v479, 1.442695
  %v484 = vpow.pop %v483
  %v485 = vmul.f32 %v480, 1.442695
  %v486 = vpow.pop %v485
  %v487 = vmul.f32 %v481, 1.442695
  %v488 = vpow.pop %v487
  %v489 = vmul.f32 %v482, 1.442695
  %v490 = vpow.pop %v489
  %v491 = vsub.f32 %v484, 1.0
  %v492 = vsub.f32 %v486, 1.0
  %v493 = vsub.f32 %v488, 1.0
  %v494 = vsub.f32 %v490, 1.0
  %v495 = vsel %vm475, %v471, %v491
  %v496 = vsel %vm476, %v472, %v492
  %v497 = vsel %vm477, %v473, %v493
  %v498 = vsel %vm478, %v474, %v494
  %503 = vrot.lane.b32.xlu0 %v495, 16
  %v504 = vpop.permute.xlu0 %503
  %505 = vrot.lane.b32.xlu0 %v496, 16
  %v506 = vpop.permute.xlu0 %505
  %507 = vrot.lane.b32.xlu0 %v497, 16
  %v508 = vpop.permute.xlu0 %507
  %509 = vrot.lane.b32.xlu0 %v498, 16
  %v510 = vpop.permute.xlu0 %509
  %vm515 = vcmask 130048
  %v516 = vsel %vm515, %v358, %v504
  %v517 = vsel %vm515, %v359, %v506
  %v518 = vsel %vm515, %v360, %v508
  %v519 = vsel %vm515, %v361, %v510
  %vm520 = vcmask 261120
  %v521 = vsel %vm520, %v516, 0.0
  %v522 = vsel %vm520, %v517, 0.0
  %v523 = vsel %vm520, %v518, 0.0
  %v524 = vsel %vm520, %v519, 0.0
  %v525 = vpack.c.bf16 %v522, %v521
  %v526 = vpack.c.bf16 %v524, %v523
  %v529 = vunpack.c.l.b16 %v525
  %v530 = vunpack.c.h.b16 %v525
  %v531 = vunpack.c.l.b16 %v526
  %v532 = vunpack.c.h.b16 %v526
  %v533 = vpack.c.b16 %v529, %v529
  %v534 = vpack.c.b16 %v530, %v530
  %v535 = vpack.c.b16 %v531, %v531
  %v536 = vpack.c.b16 %v532, %v532
  %541 = vst [vmem:[%s4] sm:$0xf] %v533
  %542 = vst [vmem:[%s4 + $0x4] sm:$0xf] %v534
  %543 = vst [vmem:[%s4 + $0x8] sm:$0xf] %v535
  %544 = vst [vmem:[%s4 + $0xc] sm:$0xf] %v536
  // Predicated region
  $region18: #{gat_sampling_forward.7} parent=0 // pred_check
    _
  $region19: #{gat_sampling_forward.7} parent=0 // pred_check_branch
    %546 = sbr.rel (0) target = $region21
  $region20: #{gat_sampling_forward.7} parent=0 // pred_region
    _
  $region21: #{gat_sampling_forward.7} parent=0 // pred_fallthru
    _
  // Predicated region
  $region22: #{gat_sampling_forward.7} parent=0 // pred_check
    _
  $region23: #{gat_sampling_forward.7} parent=0 // pred_check_branch
    %548 = sbr.rel (0) target = $region25
  $region24: #{gat_sampling_forward.7} parent=0 // pred_region
    _
  $region25: #{gat_sampling_forward.7} parent=0 // pred_fallthru
    _

// kernel: gat_sampling_forward.11
$region0: #{gat_sampling_forward.11}
  #allocation0 [shape = 'u32[]', space=smem, size = 0x4, offset = 0x4, fixed_abs, tag = 'smem constant byte address 0x4 - core index']
  #allocation1 [shape = 'u32[144,128]{1,0:T(1,128)}', space=vmem, size = 0x12000, scoped, tag = 'internal scratch']
  %s0 = inlined_call_operand.vmem [shape: bf16[128,256], index: 0, kind: input, shape index: {}]
  %s1 = inlined_call_operand.vmem [shape: f32[2,1,128], index: 1, kind: input, shape index: {}]
  %s2 = inlined_call_operand.vmem [shape: f32[2,32,1], index: 2, kind: input, shape index: {}]
  %s3 = inlined_call_operand.vmem [shape: s8[32,128], index: 3, kind: input, shape index: {}]
  %s4 = inlined_call_operand.vmem [shape: f32[32,128], index: 4, kind: output, shape index: {}]
  %s5 = sld [smem:[#allocation0]]
  $region26: #{gat_sampling_forward.11} parent=0
    _
  %s7 = ssub.s32 1, %s5
  %s8 = scalar_select 0, %s7, %s5
  // Predicated region
  $region2: #{gat_sampling_forward.11} parent=0 // pred_check
    _
  $region3: #{gat_sampling_forward.11} parent=0 // pred_check_branch
    %10 = sbr.rel (0) target = $region5
  $region4: #{gat_sampling_forward.11} parent=0 // pred_region
    _
  $region5: #{gat_sampling_forward.11} parent=0 // pred_fallthru
    _
  // Predicated region
  $region6: #{gat_sampling_forward.11} parent=0 // pred_check
    _
  $region7: #{gat_sampling_forward.11} parent=0 // pred_check_branch
    %12 = sbr.rel (0) target = $region9
  $region8: #{gat_sampling_forward.11} parent=0 // pred_region
    _
  $region9: #{gat_sampling_forward.11} parent=0 // pred_fallthru
    _
  // Predicated region
  $region10: #{gat_sampling_forward.11} parent=0 // pred_check
    _
  $region11: #{gat_sampling_forward.11} parent=0 // pred_check_branch
    %14 = sbr.rel (0) target = $region13
  $region12: #{gat_sampling_forward.11} parent=0 // pred_region
    _
  $region13: #{gat_sampling_forward.11} parent=0 // pred_fallthru
    _
  // Predicated region
  $region14: #{gat_sampling_forward.11} parent=0 // pred_check
    _
  $region15: #{gat_sampling_forward.11} parent=0 // pred_check_branch
    %16 = sbr.rel (0) target = $region17
  $region16: #{gat_sampling_forward.11} parent=0 // pred_region
    _
  $region17: #{gat_sampling_forward.11} parent=0 // pred_fallthru
    _
  %v18 = vld [vmem:[%s3] sm:$0xff]
  %v19 = vunpack.c.0.s8 %v18
  %v20 = vunpack.c.1.s8 %v18
  %v21 = vunpack.c.2.s8 %v18
  %v22 = vunpack.c.3.s8 %v18
  %v23 = vcvt.s32.f32 %v19
  %v24 = vcvt.s32.f32 %v20
  %v25 = vcvt.s32.f32 %v21
  %v26 = vcvt.s32.f32 %v22
  %vm27 = vcmp.gt.f32.partialorder %v23, 0.0
  %vm28 = vcmp.gt.f32.partialorder %v24, 0.0
  %vm29 = vcmp.gt.f32.partialorder %v25, 0.0
  %vm30 = vcmp.gt.f32.partialorder %v26, 0.0
  %v31 = vld [vmem:[%s1] sm:$0x1]
  %v32 = vld [vmem:[%s1 + $0x1] sm:$0x1]
  %v33 = vld [vmem:[%s2] sm:$0xff]
  %v34 = vld [vmem:[%s2 + $0x8] sm:$0xff]
  %v35 = vld [vmem:[%s2 + $0x10] sm:$0xff]
  %v36 = vld [vmem:[%s2 + $0x18] sm:$0xff]
  %v37 = vld [vmem:[%s2 + $0x20] sm:$0xff]
  %v38 = vld [vmem:[%s2 + $0x28] sm:$0xff]
  %v39 = vld [vmem:[%s2 + $0x30] sm:$0xff]
  %v40 = vld [vmem:[%s2 + $0x38] sm:$0xff]
  %v43 = vlaneseq
  %v44 = vshrl.u32 %v43, 7
  %v45 = vsub.s32 0, %v44
  %v46 = vrot.slane %v31, %v45
  %v47 = vlaneseq
  %v48 = vshrl.u32 %v47, 7
  %v49 = vsub.s32 0, %v48
  %v50 = vrot.slane %v32, %v49
  %54 = vset.pattern.permute.xlu0 0
  %55 = vperm.xlu0 %54, %v33
  %v56 = vpop.permute.xlu0 %55
  %59 = vset.pattern.permute.xlu0 0
  %60 = vperm.xlu0 %59, %v34
  %v61 = vpop.permute.xlu0 %60
  %64 = vset.pattern.permute.xlu0 0
  %65 = vperm.xlu0 %64, %v35
  %v66 = vpop.permute.xlu0 %65
  %69 = vset.pattern.permute.xlu0 0
  %70 = vperm.xlu0 %69, %v36
  %v71 = vpop.permute.xlu0 %70
  %74 = vset.pattern.permute.xlu0 0
  %75 = vperm.xlu0 %74, %v37
  %v76 = vpop.permute.xlu0 %75
  %79 = vset.pattern.permute.xlu0 0
  %80 = vperm.xlu0 %79, %v38
  %v81 = vpop.permute.xlu0 %80
  %84 = vset.pattern.permute.xlu0 0
  %85 = vperm.xlu0 %84, %v39
  %v86 = vpop.permute.xlu0 %85
  %89 = vset.pattern.permute.xlu0 0
  %90 = vperm.xlu0 %89, %v40
  %v91 = vpop.permute.xlu0 %90
  %v93 = vadd.f32 %v46, %v56
  %v94 = vadd.f32 %v46, %v61
  %v95 = vadd.f32 %v46, %v66
  %v96 = vadd.f32 %v46, %v71
  %v97 = vadd.f32 %v50, %v76
  %v98 = vadd.f32 %v50, %v81
  %v99 = vadd.f32 %v50, %v86
  %v100 = vadd.f32 %v50, %v91
  %vm101 = vcmp.gt.f32.partialorder %v93, 0.0
  %vm102 = vcmp.gt.f32.partialorder %v94, 0.0
  %vm103 = vcmp.gt.f32.partialorder %v95, 0.0
  %vm104 = vcmp.gt.f32.partialorder %v96, 0.0
  %vm105 = vcmp.gt.f32.partialorder %v97, 0.0
  %vm106 = vcmp.gt.f32.partialorder %v98, 0.0
  %vm107 = vcmp.gt.f32.partialorder %v99, 0.0
  %vm108 = vcmp.gt.f32.partialorder %v100, 0.0
  %v109 = vmul.f32 %v93, 0.2
  %v110 = vmul.f32 %v94, 0.2
  %v111 = vmul.f32 %v95, 0.2
  %v112 = vmul.f32 %v96, 0.2
  %v113 = vmul.f32 %v97, 0.2
  %v114 = vmul.f32 %v98, 0.2
  %v115 = vmul.f32 %v99, 0.2
  %v116 = vmul.f32 %v100, 0.2
  %v117 = vsel %vm101, %v93, %v109
  %v118 = vsel %vm102, %v94, %v110
  %v119 = vsel %vm103, %v95, %v111
  %v120 = vsel %vm104, %v96, %v112
  %v121 = vsel %vm105, %v97, %v113
  %v122 = vsel %vm106, %v98, %v114
  %v123 = vsel %vm107, %v99, %v115
  %v124 = vsel %vm108, %v100, %v116
  %v125 = vsel %vm27, 1, 0
  %v126 = vsel %vm28, 1, 0
  %v127 = vsel %vm29, 1, 0
  %v128 = vsel %vm30, 1, 0
  %vm129 = vcmp.eq.s32.totalorder %v125, 1
  %vm130 = vcmp.eq.s32.totalorder %v126, 1
  %vm131 = vcmp.eq.s32.totalorder %v127, 1
  %vm132 = vcmp.eq.s32.totalorder %v128, 1
  %v133 = vsel %vm129, %v117, -1e+30
  %v134 = vsel %vm130, %v118, -1e+30
  %v135 = vsel %vm131, %v119, -1e+30
  %v136 = vsel %vm132, %v120, -1e+30
  %v137 = vsel %vm129, %v121, -1e+30
  %v138 = vsel %vm130, %v122, -1e+30
  %v139 = vsel %vm131, %v123, -1e+30
  %v140 = vsel %vm132, %v124, -1e+30
  %141 = vmax.xlane.f32.xlu0 %v133
  %v142 = vpop.xlane.xlu0 %141
  %143 = vmax.xlane.f32.xlu0 %v134
  %v144 = vpop.xlane.xlu0 %143
  %145 = vmax.xlane.f32.xlu0 %v135
  %v146 = vpop.xlane.xlu0 %145
  %147 = vmax.xlane.f32.xlu0 %v136
  %v148 = vpop.xlane.xlu0 %147
  %149 = vmax.xlane.f32.xlu0 %v137
  %v150 = vpop.xlane.xlu0 %149
  %151 = vmax.xlane.f32.xlu0 %v138
  %v152 = vpop.xlane.xlu0 %151
  %153 = vmax.xlane.f32.xlu0 %v139
  %v154 = vpop.xlane.xlu0 %153
  %155 = vmax.xlane.f32.xlu0 %v140
  %v156 = vpop.xlane.xlu0 %155
  %v157 = vsub.f32 %v133, %v142
  %v158 = vsub.f32 %v134, %v144
  %v159 = vsub.f32 %v135, %v146
  %v160 = vsub.f32 %v136, %v148
  %v161 = vsub.f32 %v137, %v150
  %v162 = vsub.f32 %v138, %v152
  %v163 = vsub.f32 %v139, %v154
  %v164 = vsub.f32 %v140, %v156
  %v165 = vmul.f32 %v157, 1.442695
  %v166 = vpow.pop %v165
  %v167 = vmul.f32 %v158, 1.442695
  %v168 = vpow.pop %v167
  %v169 = vmul.f32 %v159, 1.442695
  %v170 = vpow.pop %v169
  %v171 = vmul.f32 %v160, 1.442695
  %v172 = vpow.pop %v171
  %v173 = vmul.f32 %v161, 1.442695
  %v174 = vpow.pop %v173
  %v175 = vmul.f32 %v162, 1.442695
  %v176 = vpow.pop %v175
  %v177 = vmul.f32 %v163, 1.442695
  %v178 = vpow.pop %v177
  %v179 = vmul.f32 %v164, 1.442695
  %v180 = vpow.pop %v179
  %v181 = vsel %vm129, %v166, 0.0
  %v182 = vsel %vm130, %v168, 0.0
  %v183 = vsel %vm131, %v170, 0.0
  %v184 = vsel %vm132, %v172, 0.0
  %v185 = vsel %vm129, %v174, 0.0
  %v186 = vsel %vm130, %v176, 0.0
  %v187 = vsel %vm131, %v178, 0.0
  %v188 = vsel %vm132, %v180, 0.0
  %v189 = vpack.c.bf16 %v182, %v181
  %v190 = vpack.c.bf16 %v184, %v183
  %v191 = vpack.c.bf16 %v186, %v185
  %v192 = vpack.c.bf16 %v188, %v187
  %v193 = vld [vmem:[%s0] sm:$0xff]
  %v194 = vld [vmem:[%s0 + $0x8] sm:$0xff]
  %v195 = vld [vmem:[%s0 + $0x10] sm:$0xff]
  %v196 = vld [vmem:[%s0 + $0x18] sm:$0xff]
  %v197 = vld [vmem:[%s0 + $0x20] sm:$0xff]
  %v198 = vld [vmem:[%s0 + $0x28] sm:$0xff]
  %v199 = vld [vmem:[%s0 + $0x30] sm:$0xff]
  %v200 = vld [vmem:[%s0 + $0x38] sm:$0xff]
  %v201 = vld [vmem:[%s0 + $0x40] sm:$0xff]
  %v202 = vld [vmem:[%s0 + $0x48] sm:$0xff]
  %v203 = vld [vmem:[%s0 + $0x50] sm:$0xff]
  %v204 = vld [vmem:[%s0 + $0x58] sm:$0xff]
  %v205 = vld [vmem:[%s0 + $0x60] sm:$0xff]
  %v206 = vld [vmem:[%s0 + $0x68] sm:$0xff]
  %v207 = vld [vmem:[%s0 + $0x70] sm:$0xff]
  %v208 = vld [vmem:[%s0 + $0x78] sm:$0xff]
  %v225 = vunpack.c.l.b16 %v193
  %v226 = vunpack.c.l.b16 %v194
  %v227 = vunpack.c.l.b16 %v195
  %v228 = vunpack.c.l.b16 %v196
  %v229 = vunpack.c.l.b16 %v197
  %v230 = vunpack.c.l.b16 %v198
  %v231 = vunpack.c.l.b16 %v199
  %v232 = vunpack.c.l.b16 %v200
  %v233 = vunpack.c.l.b16 %v201
  %v234 = vunpack.c.l.b16 %v202
  %v235 = vunpack.c.l.b16 %v203
  %v236 = vunpack.c.l.b16 %v204
  %v237 = vunpack.c.l.b16 %v205
  %v238 = vunpack.c.l.b16 %v206
  %v239 = vunpack.c.l.b16 %v207
  %v240 = vunpack.c.l.b16 %v208
  %v241 = vpack.c.b16 %v226, %v225
  %v242 = vpack.c.b16 %v228, %v227
  %v243 = vpack.c.b16 %v230, %v229
  %v244 = vpack.c.b16 %v232, %v231
  %v245 = vpack.c.b16 %v234, %v233
  %v246 = vpack.c.b16 %v236, %v235
  %v247 = vpack.c.b16 %v238, %v237
  %v248 = vpack.c.b16 %v240, %v239
  %257 = vmatprep.subr.bf16.mxu0 0
  %258 = vmatpush1.bf16.msra.mxu0 %v248
  %259 = vmatprep.subr.bf16.mxu0 0
  %260 = vmatpush1.bf16.msra.mxu0 %v247
  %261 = vmatprep.subr.bf16.mxu0 0
  %262 = vmatpush1.bf16.msra.mxu0 %v246
  %263 = vmatprep.subr.bf16.mxu0 0
  %264 = vmatpush1.bf16.msra.mxu0 %v245
  %265 = vmatprep.subr.bf16.mxu0 0
  %266 = vmatpush1.bf16.msra.mxu0 %v244
  %267 = vmatprep.subr.bf16.mxu0 0
  %268 = vmatpush1.bf16.msra.mxu0 %v243
  %269 = vmatprep.subr.bf16.mxu0 0
  %270 = vmatpush1.bf16.msra.mxu0 %v242
  %271 = vmatprep.subr.bf16.mxu0 0
  %272 = vmatpush1.bf16.msra.mxu0 %v241
  %273 = vmatprep.subr.bf16.mxu0 0
  %274 = vmatpush2.bf16.msra.mxu0 0
  %275 = vmatprep.subr.bf16.mxu0 0
  %276 = vmatpush2.bf16.msra.mxu0 0
  %277 = vmatprep.subr.bf16.mxu0 0
  %278 = vmatpush2.bf16.msra.mxu0 0
  %279 = vmatprep.subr.bf16.mxu0 0
  %280 = vmatpush2.bf16.msra.mxu0 0
  %281 = vmatprep.subr.bf16.mxu0 0
  %282 = vmatpush2.bf16.msra.mxu0 0
  %283 = vmatprep.subr.bf16.mxu0 0
  %284 = vmatpush2.bf16.msra.mxu0 0
  %285 = vmatprep.subr.bf16.mxu0 0
  %286 = vmatpush2.bf16.msra.mxu0 0
  %287 = vmatprep.subr.bf16.mxu0 0
  %288 = vmatpush2.bf16.msra.mxu0 0
  %289 = vmatprep.mubr.bf16.mxu0 0
  %290 = vmatmul.mubr.bf16.gmra.mxu0 %v189
  %v291 = vpop.f32.mrf.mxu0
  %v292 = vadd.f32 0.0, %v291
  %v293 = vpop.f32.mrf.mxu0
  %v294 = vpop.f32.mrf.mxu0
  %v295 = vadd.f32 0.0, %v294
  %v296 = vpop.f32.mrf.mxu0
  %297 = vmatprep.mubr.bf16.mxu0 0
  %298 = vmatmul.mubr.bf16.gmra.mxu0 %v190
  %v299 = vpop.f32.mrf.mxu0
  %v300 = vadd.f32 0.0, %v299
  %v301 = vpop.f32.mrf.mxu0
  %v302 = vpop.f32.mrf.mxu0
  %v303 = vadd.f32 0.0, %v302
  %v304 = vpop.f32.mrf.mxu0
  %305 = vdwg.mxu0
  %v306 = vmax.f32 %v292, 1e-20
  %v307 = vmax.f32 %v295, 1e-20
  %v308 = vmax.f32 %v300, 1e-20
  %v309 = vmax.f32 %v303, 1e-20
  %v310 = vrcp.pop %v306
  %v311 = vrcp.pop %v307
  %v312 = vrcp.pop %v308
  %v313 = vrcp.pop %v309
  %315 = vset.pattern.permute.xlu0 8
  %316 = vperm.xlu0 %315, %v310
  %v317 = vpop.permute.xlu0 %316
  %320 = vset.pattern.permute.xlu0 8
  %321 = vperm.xlu0 %320, %v311
  %v322 = vpop.permute.xlu0 %321
  %325 = vset.pattern.permute.xlu0 8
  %326 = vperm.xlu0 %325, %v312
  %v327 = vpop.permute.xlu0 %326
  %330 = vset.pattern.permute.xlu0 8
  %331 = vperm.xlu0 %330, %v313
  %v332 = vpop.permute.xlu0 %331
  %v334 = vmul.f32 %v292, %v317
  %v335 = vmul.f32 %v295, %v322
  %v336 = vmul.f32 %v300, %v327
  %v337 = vmul.f32 %v303, %v332
  %v338 = vunpack.c.h.b16 %v193
  %v339 = vunpack.c.h.b16 %v194
  %v340 = vunpack.c.h.b16 %v195
  %v341 = vunpack.c.h.b16 %v196
  %v342 = vunpack.c.h.b16 %v197
  %v343 = vunpack.c.h.b16 %v198
  %v344 = vunpack.c.h.b16 %v199
  %v345 = vunpack.c.h.b16 %v200
  %v346 = vunpack.c.h.b16 %v201
  %v347 = vunpack.c.h.b16 %v202
  %v348 = vunpack.c.h.b16 %v203
  %v349 = vunpack.c.h.b16 %v204
  %v350 = vunpack.c.h.b16 %v205
  %v351 = vunpack.c.h.b16 %v206
  %v352 = vunpack.c.h.b16 %v207
  %v353 = vunpack.c.h.b16 %v208
  %v354 = vpack.c.b16 %v339, %v338
  %v355 = vpack.c.b16 %v341, %v340
  %v356 = vpack.c.b16 %v343, %v342
  %v357 = vpack.c.b16 %v345, %v344
  %v358 = vpack.c.b16 %v347, %v346
  %v359 = vpack.c.b16 %v349, %v348
  %v360 = vpack.c.b16 %v351, %v350
  %v361 = vpack.c.b16 %v353, %v352
  %370 = vmatprep.subr.bf16.mxu0 0
  %371 = vmatpush1.bf16.msra.mxu0 %v361
  %372 = vmatprep.subr.bf16.mxu0 0
  %373 = vmatpush1.bf16.msra.mxu0 %v360
  %374 = vmatprep.subr.bf16.mxu0 0
  %375 = vmatpush1.bf16.msra.mxu0 %v359
  %376 = vmatprep.subr.bf16.mxu0 0
  %377 = vmatpush1.bf16.msra.mxu0 %v358
  %378 = vmatprep.subr.bf16.mxu0 0
  %379 = vmatpush1.bf16.msra.mxu0 %v357
  %380 = vmatprep.subr.bf16.mxu0 0
  %381 = vmatpush1.bf16.msra.mxu0 %v356
  %382 = vmatprep.subr.bf16.mxu0 0
  %383 = vmatpush1.bf16.msra.mxu0 %v355
  %384 = vmatprep.subr.bf16.mxu0 0
  %385 = vmatpush1.bf16.msra.mxu0 %v354
  %386 = vmatprep.subr.bf16.mxu0 0
  %387 = vmatpush2.bf16.msra.mxu0 0
  %388 = vmatprep.subr.bf16.mxu0 0
  %389 = vmatpush2.bf16.msra.mxu0 0
  %390 = vmatprep.subr.bf16.mxu0 0
  %391 = vmatpush2.bf16.msra.mxu0 0
  %392 = vmatprep.subr.bf16.mxu0 0
  %393 = vmatpush2.bf16.msra.mxu0 0
  %394 = vmatprep.subr.bf16.mxu0 0
  %395 = vmatpush2.bf16.msra.mxu0 0
  %396 = vmatprep.subr.bf16.mxu0 0
  %397 = vmatpush2.bf16.msra.mxu0 0
  %398 = vmatprep.subr.bf16.mxu0 0
  %399 = vmatpush2.bf16.msra.mxu0 0
  %400 = vmatprep.subr.bf16.mxu0 0
  %401 = vmatpush2.bf16.msra.mxu0 0
  %402 = vmatprep.mubr.bf16.mxu0 0
  %403 = vmatmul.mubr.bf16.gmra.mxu0 %v191
  %v404 = vpop.f32.mrf.mxu0
  %v405 = vadd.f32 0.0, %v404
  %v406 = vpop.f32.mrf.mxu0
  %v407 = vpop.f32.mrf.mxu0
  %v408 = vadd.f32 0.0, %v407
  %v409 = vpop.f32.mrf.mxu0
  %410 = vmatprep.mubr.bf16.mxu0 0
  %411 = vmatmul.mubr.bf16.gmra.mxu0 %v192
  %v412 = vpop.f32.mrf.mxu0
  %v413 = vadd.f32 0.0, %v412
  %v414 = vpop.f32.mrf.mxu0
  %v415 = vpop.f32.mrf.mxu0
  %v416 = vadd.f32 0.0, %v415
  %v417 = vpop.f32.mrf.mxu0
  %418 = vdwg.mxu0
  %v419 = vmax.f32 %v405, 1e-20
  %v420 = vmax.f32 %v408, 1e-20
  %v421 = vmax.f32 %v413, 1e-20
  %v422 = vmax.f32 %v416, 1e-20
  %v423 = vrcp.pop %v419
  %v424 = vrcp.pop %v420
  %v425 = vrcp.pop %v421
  %v426 = vrcp.pop %v422
  %428 = vset.pattern.permute.xlu0 8
  %429 = vperm.xlu0 %428, %v423
  %v430 = vpop.permute.xlu0 %429
  %433 = vset.pattern.permute.xlu0 8
  %434 = vperm.xlu0 %433, %v424
  %v435 = vpop.permute.xlu0 %434
  %438 = vset.pattern.permute.xlu0 8
  %439 = vperm.xlu0 %438, %v425
  %v440 = vpop.permute.xlu0 %439
  %443 = vset.pattern.permute.xlu0 8
  %444 = vperm.xlu0 %443, %v426
  %v445 = vpop.permute.xlu0 %444
  %v447 = vmul.f32 %v405, %v430
  %v448 = vmul.f32 %v408, %v435
  %v449 = vmul.f32 %v413, %v440
  %v450 = vmul.f32 %v416, %v445
  %v451 = vadd.f32 %v334, %v447
  %v452 = vadd.f32 %v335, %v448
  %v453 = vadd.f32 %v336, %v449
  %v454 = vadd.f32 %v337, %v450
  %v455 = vmul.f32 %v451, 0.5
  %v456 = vmul.f32 %v452, 0.5
  %v457 = vmul.f32 %v453, 0.5
  %v458 = vmul.f32 %v454, 0.5
  %vm459 = vcmask 64512
  %v460 = vsel %vm459, %v455, 0.0
  %v461 = vsel %vm459, %v456, 0.0
  %v462 = vsel %vm459, %v457, 0.0
  %v463 = vsel %vm459, %v458, 0.0
  %464 = vst [vmem:[%s4] sm:$0xff] %v460
  %465 = vst [vmem:[%s4 + $0x8] sm:$0xff] %v461
  %466 = vst [vmem:[%s4 + $0x10] sm:$0xff] %v462
  %467 = vst [vmem:[%s4 + $0x18] sm:$0xff] %v463
  // Predicated region
  $region18: #{gat_sampling_forward.11} parent=0 // pred_check
    _
  $region19: #{gat_sampling_forward.11} parent=0 // pred_check_branch
    %469 = sbr.rel (0) target = $region21
  $region20: #{gat_sampling_forward.11} parent=0 // pred_region
    _
  $region21: #{gat_sampling_forward.11} parent=0 // pred_fallthru
    _
  // Predicated region
  $region22: #{gat_sampling_forward.11} parent=0 // pred_check
    _
  $region23: #{gat_sampling_forward.11} parent=0 // pred_check_branch
    %471 = sbr.rel (0) target = $region25
  $region24: #{gat_sampling_forward.11} parent=0 // pred_region
    _
  $region25: #{gat_sampling_forward.11} parent=0 // pred_fallthru
    _

</llo_original>
